<compile_context>
chip_gen: v6e
topology: v6e:2x2x1
jax: 0.10.0
libtpu: 0.0.40
codegen_flags: <defaults>
</compile_context>

<pallas_src>
import jax
import jax.numpy as jnp
import numpy as np
from jax.experimental import pallas as pl
from jax.experimental.pallas import tpu as pltpu


# 3x3 neighbourhood offsets; k = (dy+1)*3 + (dx+1) matches the weight layout.
_OFFSETS = [(dy, dx) for dy in (-1, 0, 1) for dx in (-1, 0, 1)]


# -----------------------------------------------------------------------------
# Kernel
# -----------------------------------------------------------------------------
def make_rdb_kernel(H, W, S, in_channels, growth_rate, num_dense_layer):
    C_total = in_channels + num_dense_layer * growth_rate

    def kernel(*refs):
        # refs = x, masks, (w_i, b_i) * L, w11_eff, b11, out, feat, patch
        x_ref = refs[0]
        masks_ref = refs[1]
        dense_refs = refs[2:2 + 2 * num_dense_layer]
        w11_ref = refs[2 + 2 * num_dense_layer]
        b11_ref = refs[3 + 2 * num_dense_layer]
        o_ref = refs[4 + 2 * num_dense_layer]
        feat_ref = refs[5 + 2 * num_dense_layer]
        patch_ref = refs[6 + 2 * num_dense_layer]

        # Seed the growing feature map with x (channels 0..Cin-1 stay == x).
        feat_ref[0:in_channels, :] = x_ref[...]

        c = in_channels
        for i in range(num_dense_layer):
            w2 = dense_refs[2 * i][...]        # (G, 9*c), im2col-ordered
            b = dense_refs[2 * i + 1][...]     # (G, 1)
            feat = feat_ref[0:c, :]            # (c, S)

            # Build the im2col patch: row block k holds the feature map
            # shifted by (dy, dx), border positions zeroed by the mask
            # (this *is* the SAME zero-padding).
            for k, (dy, dx) in enumerate(_OFFSETS):
                s = dy * W + dx
                if s == 0:
                    shifted = feat
                else:
                    shifted = pltpu.roll(feat, shift=(-s) % S, axis=1)
                if not (dy == 0 and dx == 0):
                    shifted = shifted * masks_ref[k:k + 1, :]
                patch_ref[k * c:(k + 1) * c, :] = shifted

            # Single fused matmul: (G, 9c) x (9c, S) -> (G, S), f32 accum.
            out = jnp.dot(w2, patch_ref[0:9 * c, :],
                          preferred_element_type=jnp.float32) + b
            out = jnp.maximum(out, 0.0)

            # "concat" = append the new growth channels.
            feat_ref[c:c + growth_rate, :] = out
            c += growth_rate

        # 1x1 conv over all channels; residual is folded into w11_eff.
        y = jnp.dot(w11_ref[...], feat_ref[...],
                    preferred_element_type=jnp.float32) + b11_ref[...]
        o_ref[...] = y.astype(o_ref.dtype)   # lane-dense (Cin, S) store

    return kernel, C_total


# -----------------------------------------------------------------------------
# Wrapper
# -----------------------------------------------------------------------------
def rdb_forward(x_nchw, dense_ws, dense_bs, w11, b11):
    N, Cin, H, W = x_nchw.shape
    L = len(dense_ws)
    G = dense_ws[0].shape[-1]
    C_total = Cin + L * G
    S = N * H * W

    # Layout plumbing: NCHW -> (C, N*H*W)  (spatial+batch on lanes).
    x2d = jnp.transpose(x_nchw, (1, 0, 2, 3)).reshape(Cin, S)

    # Border-validity masks per 3x3 offset (host-computed constants).
    yy, xx = np.meshgrid(np.arange(H), np.arange(W), indexing="ij")
    yy = np.tile(yy.reshape(-1), N)
    xx = np.tile(xx.reshape(-1), N)
    masks_np = np.ones((9, S), np.float32)
    for k, (dy, dx) in enumerate(_OFFSETS):
        valid = ((yy + dy >= 0) & (yy + dy <= H - 1) &
                 (xx + dx >= 0) & (xx + dx <= W - 1))
        masks_np[k] = valid.astype(np.float32)
    masks = jnp.asarray(masks_np)

    # Dense 3x3 weights (HWIO) -> im2col layout (G, 9*c), column = k*c + ci.
    w2s, b2s = [], []
    c = Cin
    for wgt, bias in zip(dense_ws, dense_bs):
        w2s.append(jnp.transpose(wgt, (3, 0, 1, 2)).reshape(G, 9 * c))
        b2s.append(bias.reshape(G, 1))
        c += G

    # 1x1 conv with the residual identity folded in.
    w11_eff = w11.T + jnp.concatenate(
        [jnp.eye(Cin, dtype=w11.dtype),
         jnp.zeros((Cin, C_total - Cin), w11.dtype)], axis=1)
    b11c = b11.reshape(Cin, 1)

    kernel, _ = make_rdb_kernel(H, W, S, Cin, G, L)

    inputs = [x2d, masks]
    in_specs = [pl.BlockSpec((Cin, S), lambda i: (0, 0)),
                pl.BlockSpec((9, S), lambda i: (0, 0))]
    for w2, b2 in zip(w2s, b2s):
        inputs += [w2, b2]
        in_specs += [pl.BlockSpec(w2.shape, lambda i: (0, 0)),
                     pl.BlockSpec((G, 1), lambda i: (0, 0))]
    inputs += [w11_eff, b11c]
    in_specs += [pl.BlockSpec((Cin, C_total), lambda i: (0, 0)),
                 pl.BlockSpec((Cin, 1), lambda i: (0, 0))]

    c_last = Cin + (L - 1) * G if L > 0 else Cin   # widest im2col input

    y2d = pl.pallas_call(
        kernel,
        out_shape=jax.ShapeDtypeStruct((Cin, S), x_nchw.dtype),
        grid_spec=pltpu.PrefetchScalarGridSpec(
            num_scalar_prefetch=0,
            grid=(1,),
            in_specs=in_specs,
            out_specs=pl.BlockSpec((Cin, S), lambda i: (0, 0)),
            scratch_shapes=[
                pltpu.VMEM((C_total, S), jnp.float32),      # growing feature map
                pltpu.VMEM((9 * c_last, S), jnp.float32),   # im2col patch
            ],
        ),
        compiler_params=pltpu.CompilerParams(
            dimension_semantics=("arbitrary",)),
    )(*inputs)

    # (C, N*H*W) -> NCHW
    return jnp.transpose(y2d.reshape(Cin, N, H, W), (1, 0, 2, 3))


# -----------------------------------------------------------------------------
# Pure-JAX reference (for correctness check)
# -----------------------------------------------------------------------------
def rdb_reference(x_nchw, dense_ws, dense_bs, w11, b11):
    x = jnp.transpose(x_nchw, (0, 2, 3, 1))  # NHWC
    out = x
    for w, b in zip(dense_ws, dense_bs):
        c = jax.lax.conv_general_dilated(
            out, w, (1, 1), "SAME",
            dimension_numbers=("NHWC", "HWIO", "NHWC"))
        c = c + b.reshape(1, 1, 1, -1)
        out = jnp.concatenate([out, jnp.maximum(c, 0.0)], axis=-1)
    y = jnp.einsum("nhwc,co->nhwo", out, w11) + b11.reshape(1, 1, 1, -1)
    y = y + x
    return jnp.transpose(y, (0, 3, 1, 2))


# -----------------------------------------------------------------------------
# Main
# -----------------------------------------------------------------------------
if __name__ == "__main__":
    # Module hyper-params (small, consistent with the PyTorch module).
    in_channels = 4
    growth_rate = 4
    num_dense_layer = 3
    reduction = -1  # -> NoSEBlock (identity)

    N, H, W = 2, 16, 16

    key = jax.random.PRNGKey(0)
    k_x, key = jax.random.split(key)
    x = jax.random.normal(k_x, (N, in_channels, H, W), jnp.float32)

    # Deterministic synthetic parameters (HWIO layout for 3x3 convs).
    dense_ws, dense_bs = [], []
    c = in_channels
    for _ in range(num_dense_layer):
        kw, kb, key = jax.random.split(key, 3)
        dense_ws.append(
            0.1 * jax.random.normal(kw, (3, 3, c, growth_rate), jnp.float32))
        dense_bs.append(
            0.1 * jax.random.normal(kb, (growth_rate,), jnp.float32))
        c += growth_rate
    kw, kb, key = jax.random.split(key, 3)
    w11 = 0.1 * jax.random.normal(kw, (c, in_channels), jnp.float32)
    b11 = 0.1 * jax.random.normal(kb, (in_channels,), jnp.float32)

    y = rdb_forward(x, dense_ws, dense_bs, w11, b11)
    y = jax.block_until_ready(y)

    y_ref = rdb_reference(x, dense_ws, dense_bs, w11, b11)
    assert y.shape == (N, in_channels, H, W)
    assert jnp.allclose(y, y_ref, atol=1e-4, rtol=1e-4), (
        float(jnp.max(jnp.abs(y - y_ref))))

    print("KERNEL_OK")
</pallas_src>

<mosaic_0001>
module attributes {stable_mosaic.version = 11 : i64} {
  func.func @kernel(%arg0: i32, %arg1: memref<4x512xf32, #tpu.memory_space<vmem>>, %arg2: memref<9x512xf32, #tpu.memory_space<vmem>>, %arg3: memref<4x36xf32, #tpu.memory_space<vmem>>, %arg4: memref<4x1xf32, #tpu.memory_space<vmem>>, %arg5: memref<4x72xf32, #tpu.memory_space<vmem>>, %arg6: memref<4x1xf32, #tpu.memory_space<vmem>>, %arg7: memref<4x108xf32, #tpu.memory_space<vmem>>, %arg8: memref<4x1xf32, #tpu.memory_space<vmem>>, %arg9: memref<4x16xf32, #tpu.memory_space<vmem>>, %arg10: memref<4x1xf32, #tpu.memory_space<vmem>>, %arg11: memref<4x512xf32, #tpu.memory_space<vmem>>, %arg12: memref<16x512xf32, #tpu.memory_space<vmem>>, %arg13: memref<108x512xf32, #tpu.memory_space<vmem>>) attributes {dimension_semantics = [#tpu.dimension_semantics<arbitrary>], iteration_bounds = array<i64: 1>, scalar_prefetch = 0 : i64, scratch_operands = 2 : i64, tpu.core_type = #tpu.core_type<tc>, window_params = [{pipeline_mode = #tpu.pipeline_mode<synchronous>, transform_indices = @transform_0, window_bounds = array<i64: 4, 512>}, {pipeline_mode = #tpu.pipeline_mode<synchronous>, transform_indices = @transform_1, window_bounds = array<i64: 9, 512>}, {pipeline_mode = #tpu.pipeline_mode<synchronous>, transform_indices = @transform_2, window_bounds = array<i64: 4, 36>}, {pipeline_mode = #tpu.pipeline_mode<synchronous>, transform_indices = @transform_3, window_bounds = array<i64: 4, 1>}, {pipeline_mode = #tpu.pipeline_mode<synchronous>, transform_indices = @transform_4, window_bounds = array<i64: 4, 72>}, {pipeline_mode = #tpu.pipeline_mode<synchronous>, transform_indices = @transform_5, window_bounds = array<i64: 4, 1>}, {pipeline_mode = #tpu.pipeline_mode<synchronous>, transform_indices = @transform_6, window_bounds = array<i64: 4, 108>}, {pipeline_mode = #tpu.pipeline_mode<synchronous>, transform_indices = @transform_7, window_bounds = array<i64: 4, 1>}, {pipeline_mode = #tpu.pipeline_mode<synchronous>, transform_indices = @transform_8, window_bounds = array<i64: 4, 16>}, {pipeline_mode = #tpu.pipeline_mode<synchronous>, transform_indices = @transform_9, window_bounds = array<i64: 4, 1>}, {pipeline_mode = #tpu.pipeline_mode<synchronous>, transform_indices = @transform_10, window_bounds = array<i64: 4, 512>}]} {
    %c0 = arith.constant 0 : index
    %c0_0 = arith.constant 0 : index
    %0 = vector.load %arg1[%c0, %c0_0] : memref<4x512xf32, #tpu.memory_space<vmem>>, vector<4x512xf32>
    %c0_1 = arith.constant 0 : index
    %c0_2 = arith.constant 0 : index
    %1 = vector.load %arg12[%c0_1, %c0_2] : memref<16x512xf32, #tpu.memory_space<vmem>>, vector<4x512xf32>
    tpu.vector_store %arg12[%c0_1, %c0_2], %0 {strides = array<i32>} : memref<16x512xf32, #tpu.memory_space<vmem>>, vector<4x512xf32>,
    %c0_3 = arith.constant 0 : index
    %c0_4 = arith.constant 0 : index
    %2 = vector.load %arg3[%c0_3, %c0_4] : memref<4x36xf32, #tpu.memory_space<vmem>>, vector<4x36xf32>
    %c0_5 = arith.constant 0 : index
    %c0_6 = arith.constant 0 : index
    %3 = vector.load %arg4[%c0_5, %c0_6] : memref<4x1xf32, #tpu.memory_space<vmem>>, vector<4x1xf32>
    %c0_7 = arith.constant 0 : index
    %c0_8 = arith.constant 0 : index
    %4 = vector.load %arg12[%c0_7, %c0_8] : memref<16x512xf32, #tpu.memory_space<vmem>>, vector<4x512xf32>
    %c17_i32 = arith.constant 17 : i32
    %5 = tpu.dynamic_rotate %4 by %c17_i32 dim 1 : vector<4x512xf32>, i32 -> vector<4x512xf32>
    %c0_9 = arith.constant 0 : index
    %c0_10 = arith.constant 0 : index
    %6 = vector.load %arg2[%c0_9, %c0_10] : memref<9x512xf32, #tpu.memory_space<vmem>>, vector<1x512xf32>
    %7 = vector.broadcast %6 : vector<1x512xf32> to vector<4x512xf32>
    %8 = arith.mulf %5, %7 : vector<4x512xf32>
    %c0_11 = arith.constant 0 : index
    %c0_12 = arith.constant 0 : index
    %9 = vector.load %arg13[%c0_11, %c0_12] : memref<108x512xf32, #tpu.memory_space<vmem>>, vector<4x512xf32>
    tpu.vector_store %arg13[%c0_11, %c0_12], %8 {strides = array<i32>} : memref<108x512xf32, #tpu.memory_space<vmem>>, vector<4x512xf32>,
    %c16_i32 = arith.constant 16 : i32
    %10 = tpu.dynamic_rotate %4 by %c16_i32 dim 1 : vector<4x512xf32>, i32 -> vector<4x512xf32>
    %c1 = arith.constant 1 : index
    %c0_13 = arith.constant 0 : index
    %11 = vector.load %arg2[%c1, %c0_13] : memref<9x512xf32, #tpu.memory_space<vmem>>, vector<1x512xf32>
    %12 = vector.broadcast %11 : vector<1x512xf32> to vector<4x512xf32>
    %13 = arith.mulf %10, %12 : vector<4x512xf32>
    %c4 = arith.constant 4 : index
    %c0_14 = arith.constant 0 : index
    %14 = vector.load %arg13[%c4, %c0_14] : memref<108x512xf32, #tpu.memory_space<vmem>>, vector<4x512xf32>
    tpu.vector_store %arg13[%c4, %c0_14], %13 {strides = array<i32>} : memref<108x512xf32, #tpu.memory_space<vmem>>, vector<4x512xf32>,
    %c15_i32 = arith.constant 15 : i32
    %15 = tpu.dynamic_rotate %4 by %c15_i32 dim 1 : vector<4x512xf32>, i32 -> vector<4x512xf32>
    %c2 = arith.constant 2 : index
    %c0_15 = arith.constant 0 : index
    %16 = vector.load %arg2[%c2, %c0_15] : memref<9x512xf32, #tpu.memory_space<vmem>>, vector<1x512xf32>
    %17 = vector.broadcast %16 : vector<1x512xf32> to vector<4x512xf32>
    %18 = arith.mulf %15, %17 : vector<4x512xf32>
    %c8 = arith.constant 8 : index
    %c0_16 = arith.constant 0 : index
    %19 = vector.load %arg13[%c8, %c0_16] : memref<108x512xf32, #tpu.memory_space<vmem>>, vector<4x512xf32>
    tpu.vector_store %arg13[%c8, %c0_16], %18 {strides = array<i32>} : memref<108x512xf32, #tpu.memory_space<vmem>>, vector<4x512xf32>,
    %c1_i32 = arith.constant 1 : i32
    %20 = tpu.dynamic_rotate %4 by %c1_i32 dim 1 : vector<4x512xf32>, i32 -> vector<4x512xf32>
    %c3 = arith.constant 3 : index
    %c0_17 = arith.constant 0 : index
    %21 = vector.load %arg2[%c3, %c0_17] : memref<9x512xf32, #tpu.memory_space<vmem>>, vector<1x512xf32>
    %22 = vector.broadcast %21 : vector<1x512xf32> to vector<4x512xf32>
    %23 = arith.mulf %20, %22 : vector<4x512xf32>
    %c12 = arith.constant 12 : index
    %c0_18 = arith.constant 0 : index
    %24 = vector.load %arg13[%c12, %c0_18] : memref<108x512xf32, #tpu.memory_space<vmem>>, vector<4x512xf32>
    tpu.vector_store %arg13[%c12, %c0_18], %23 {strides = array<i32>} : memref<108x512xf32, #tpu.memory_space<vmem>>, vector<4x512xf32>,
    %c16 = arith.constant 16 : index
    %c0_19 = arith.constant 0 : index
    %25 = vector.load %arg13[%c16, %c0_19] : memref<108x512xf32, #tpu.memory_space<vmem>>, vector<4x512xf32>
    tpu.vector_store %arg13[%c16, %c0_19], %4 {strides = array<i32>} : memref<108x512xf32, #tpu.memory_space<vmem>>, vector<4x512xf32>,
    %c511_i32 = arith.constant 511 : i32
    %26 = tpu.dynamic_rotate %4 by %c511_i32 dim 1 : vector<4x512xf32>, i32 -> vector<4x512xf32>
    %c5 = arith.constant 5 : index
    %c0_20 = arith.constant 0 : index
    %27 = vector.load %arg2[%c5, %c0_20] : memref<9x512xf32, #tpu.memory_space<vmem>>, vector<1x512xf32>
    %28 = vector.broadcast %27 : vector<1x512xf32> to vector<4x512xf32>
    %29 = arith.mulf %26, %28 : vector<4x512xf32>
    %c20 = arith.constant 20 : index
    %c0_21 = arith.constant 0 : index
    %30 = vector.load %arg13[%c20, %c0_21] : memref<108x512xf32, #tpu.memory_space<vmem>>, vector<4x512xf32>
    tpu.vector_store %arg13[%c20, %c0_21], %29 {strides = array<i32>} : memref<108x512xf32, #tpu.memory_space<vmem>>, vector<4x512xf32>,
    %c497_i32 = arith.constant 497 : i32
    %31 = tpu.dynamic_rotate %4 by %c497_i32 dim 1 : vector<4x512xf32>, i32 -> vector<4x512xf32>
    %c6 = arith.constant 6 : index
    %c0_22 = arith.constant 0 : index
    %32 = vector.load %arg2[%c6, %c0_22] : memref<9x512xf32, #tpu.memory_space<vmem>>, vector<1x512xf32>
    %33 = vector.broadcast %32 : vector<1x512xf32> to vector<4x512xf32>
    %34 = arith.mulf %31, %33 : vector<4x512xf32>
    %c24 = arith.constant 24 : index
    %c0_23 = arith.constant 0 : index
    %35 = vector.load %arg13[%c24, %c0_23] : memref<108x512xf32, #tpu.memory_space<vmem>>, vector<4x512xf32>
    tpu.vector_store %arg13[%c24, %c0_23], %34 {strides = array<i32>} : memref<108x512xf32, #tpu.memory_space<vmem>>, vector<4x512xf32>,
    %c496_i32 = arith.constant 496 : i32
    %36 = tpu.dynamic_rotate %4 by %c496_i32 dim 1 : vector<4x512xf32>, i32 -> vector<4x512xf32>
    %c7 = arith.constant 7 : index
    %c0_24 = arith.constant 0 : index
    %37 = vector.load %arg2[%c7, %c0_24] : memref<9x512xf32, #tpu.memory_space<vmem>>, vector<1x512xf32>
    %38 = vector.broadcast %37 : vector<1x512xf32> to vector<4x512xf32>
    %39 = arith.mulf %36, %38 : vector<4x512xf32>
    %c28 = arith.constant 28 : index
    %c0_25 = arith.constant 0 : index
    %40 = vector.load %arg13[%c28, %c0_25] : memref<108x512xf32, #tpu.memory_space<vmem>>, vector<4x512xf32>
    tpu.vector_store %arg13[%c28, %c0_25], %39 {strides = array<i32>} : memref<108x512xf32, #tpu.memory_space<vmem>>, vector<4x512xf32>,
    %c495_i32 = arith.constant 495 : i32
    %41 = tpu.dynamic_rotate %4 by %c495_i32 dim 1 : vector<4x512xf32>, i32 -> vector<4x512xf32>
    %c8_26 = arith.constant 8 : index
    %c0_27 = arith.constant 0 : index
    %42 = vector.load %arg2[%c8_26, %c0_27] : memref<9x512xf32, #tpu.memory_space<vmem>>, vector<1x512xf32>
    %43 = vector.broadcast %42 : vector<1x512xf32> to vector<4x512xf32>
    %44 = arith.mulf %41, %43 : vector<4x512xf32>
    %c32 = arith.constant 32 : index
    %c0_28 = arith.constant 0 : index
    %45 = vector.load %arg13[%c32, %c0_28] : memref<108x512xf32, #tpu.memory_space<vmem>>, vector<4x512xf32>
    tpu.vector_store %arg13[%c32, %c0_28], %44 {strides = array<i32>} : memref<108x512xf32, #tpu.memory_space<vmem>>, vector<4x512xf32>,
    %c0_29 = arith.constant 0 : index
    %c0_30 = arith.constant 0 : index
    %46 = vector.load %arg13[%c0_29, %c0_30] : memref<108x512xf32, #tpu.memory_space<vmem>>, vector<36x512xf32>
    %cst = arith.constant dense<0.000000e+00> : vector<4x512xf32>
    %47 = tpu.matmul %2, %46, %cst {dimension_numbers = #tpu.dot_dimension_numbers<[1], [0], [0], [1], [0, 0, 1, 1], [], []>} : vector<4x36xf32>, vector<36x512xf32>, vector<4x512xf32> -> vector<4x512xf32>
    %48 = vector.broadcast %3 : vector<4x1xf32> to vector<4x512xf32>
    %49 = arith.addf %47, %48 : vector<4x512xf32>
    %cst_31 = arith.constant 0.000000e+00 : f32
    %50 = vector.broadcast %cst_31 : f32 to vector<4x512xf32>
    %51 = arith.maximumf %49, %50 : vector<4x512xf32>
    %c4_32 = arith.constant 4 : index
    %c0_33 = arith.constant 0 : index
    %52 = vector.load %arg12[%c4_32, %c0_33] : memref<16x512xf32, #tpu.memory_space<vmem>>, vector<4x512xf32>
    tpu.vector_store %arg12[%c4_32, %c0_33], %51 {strides = array<i32>} : memref<16x512xf32, #tpu.memory_space<vmem>>, vector<4x512xf32>,
    %c0_34 = arith.constant 0 : index
    %c0_35 = arith.constant 0 : index
    %53 = vector.load %arg5[%c0_34, %c0_35] : memref<4x72xf32, #tpu.memory_space<vmem>>, vector<4x72xf32>
    %c0_36 = arith.constant 0 : index
    %c0_37 = arith.constant 0 : index
    %54 = vector.load %arg6[%c0_36, %c0_37] : memref<4x1xf32, #tpu.memory_space<vmem>>, vector<4x1xf32>
    %c0_38 = arith.constant 0 : index
    %c0_39 = arith.constant 0 : index
    %55 = vector.load %arg12[%c0_38, %c0_39] : memref<16x512xf32, #tpu.memory_space<vmem>>, vector<8x512xf32>
    %c17_i32_40 = arith.constant 17 : i32
    %56 = tpu.dynamic_rotate %55 by %c17_i32_40 dim 1 : vector<8x512xf32>, i32 -> vector<8x512xf32>
    %c0_41 = arith.constant 0 : index
    %c0_42 = arith.constant 0 : index
    %57 = vector.load %arg2[%c0_41, %c0_42] : memref<9x512xf32, #tpu.memory_space<vmem>>, vector<1x512xf32>
    %58 = vector.broadcast %57 : vector<1x512xf32> to vector<8x512xf32>
    %59 = arith.mulf %56, %58 : vector<8x512xf32>
    %c0_43 = arith.constant 0 : index
    %c0_44 = arith.constant 0 : index
    %60 = vector.load %arg13[%c0_43, %c0_44] : memref<108x512xf32, #tpu.memory_space<vmem>>, vector<8x512xf32>
    tpu.vector_store %arg13[%c0_43, %c0_44], %59 {strides = array<i32>} : memref<108x512xf32, #tpu.memory_space<vmem>>, vector<8x512xf32>,
    %c16_i32_45 = arith.constant 16 : i32
    %61 = tpu.dynamic_rotate %55 by %c16_i32_45 dim 1 : vector<8x512xf32>, i32 -> vector<8x512xf32>
    %c1_46 = arith.constant 1 : index
    %c0_47 = arith.constant 0 : index
    %62 = vector.load %arg2[%c1_46, %c0_47] : memref<9x512xf32, #tpu.memory_space<vmem>>, vector<1x512xf32>
    %63 = vector.broadcast %62 : vector<1x512xf32> to vector<8x512xf32>
    %64 = arith.mulf %61, %63 : vector<8x512xf32>
    %c8_48 = arith.constant 8 : index
    %c0_49 = arith.constant 0 : index
    %65 = vector.load %arg13[%c8_48, %c0_49] : memref<108x512xf32, #tpu.memory_space<vmem>>, vector<8x512xf32>
    tpu.vector_store %arg13[%c8_48, %c0_49], %64 {strides = array<i32>} : memref<108x512xf32, #tpu.memory_space<vmem>>, vector<8x512xf32>,
    %c15_i32_50 = arith.constant 15 : i32
    %66 = tpu.dynamic_rotate %55 by %c15_i32_50 dim 1 : vector<8x512xf32>, i32 -> vector<8x512xf32>
    %c2_51 = arith.constant 2 : index
    %c0_52 = arith.constant 0 : index
    %67 = vector.load %arg2[%c2_51, %c0_52] : memref<9x512xf32, #tpu.memory_space<vmem>>, vector<1x512xf32>
    %68 = vector.broadcast %67 : vector<1x512xf32> to vector<8x512xf32>
    %69 = arith.mulf %66, %68 : vector<8x512xf32>
    %c16_53 = arith.constant 16 : index
    %c0_54 = arith.constant 0 : index
    %70 = vector.load %arg13[%c16_53, %c0_54] : memref<108x512xf32, #tpu.memory_space<vmem>>, vector<8x512xf32>
    tpu.vector_store %arg13[%c16_53, %c0_54], %69 {strides = array<i32>} : memref<108x512xf32, #tpu.memory_space<vmem>>, vector<8x512xf32>,
    %c1_i32_55 = arith.constant 1 : i32
    %71 = tpu.dynamic_rotate %55 by %c1_i32_55 dim 1 : vector<8x512xf32>, i32 -> vector<8x512xf32>
    %c3_56 = arith.constant 3 : index
    %c0_57 = arith.constant 0 : index
    %72 = vector.load %arg2[%c3_56, %c0_57] : memref<9x512xf32, #tpu.memory_space<vmem>>, vector<1x512xf32>
    %73 = vector.broadcast %72 : vector<1x512xf32> to vector<8x512xf32>
    %74 = arith.mulf %71, %73 : vector<8x512xf32>
    %c24_58 = arith.constant 24 : index
    %c0_59 = arith.constant 0 : index
    %75 = vector.load %arg13[%c24_58, %c0_59] : memref<108x512xf32, #tpu.memory_space<vmem>>, vector<8x512xf32>
    tpu.vector_store %arg13[%c24_58, %c0_59], %74 {strides = array<i32>} : memref<108x512xf32, #tpu.memory_space<vmem>>, vector<8x512xf32>,
    %c32_60 = arith.constant 32 : index
    %c0_61 = arith.constant 0 : index
    %76 = vector.load %arg13[%c32_60, %c0_61] : memref<108x512xf32, #tpu.memory_space<vmem>>, vector<8x512xf32>
    tpu.vector_store %arg13[%c32_60, %c0_61], %55 {strides = array<i32>} : memref<108x512xf32, #tpu.memory_space<vmem>>, vector<8x512xf32>,
    %c511_i32_62 = arith.constant 511 : i32
    %77 = tpu.dynamic_rotate %55 by %c511_i32_62 dim 1 : vector<8x512xf32>, i32 -> vector<8x512xf32>
    %c5_63 = arith.constant 5 : index
    %c0_64 = arith.constant 0 : index
    %78 = vector.load %arg2[%c5_63, %c0_64] : memref<9x512xf32, #tpu.memory_space<vmem>>, vector<1x512xf32>
    %79 = vector.broadcast %78 : vector<1x512xf32> to vector<8x512xf32>
    %80 = arith.mulf %77, %79 : vector<8x512xf32>
    %c40 = arith.constant 40 : index
    %c0_65 = arith.constant 0 : index
    %81 = vector.load %arg13[%c40, %c0_65] : memref<108x512xf32, #tpu.memory_space<vmem>>, vector<8x512xf32>
    tpu.vector_store %arg13[%c40, %c0_65], %80 {strides = array<i32>} : memref<108x512xf32, #tpu.memory_space<vmem>>, vector<8x512xf32>,
    %c497_i32_66 = arith.constant 497 : i32
    %82 = tpu.dynamic_rotate %55 by %c497_i32_66 dim 1 : vector<8x512xf32>, i32 -> vector<8x512xf32>
    %c6_67 = arith.constant 6 : index
    %c0_68 = arith.constant 0 : index
    %83 = vector.load %arg2[%c6_67, %c0_68] : memref<9x512xf32, #tpu.memory_space<vmem>>, vector<1x512xf32>
    %84 = vector.broadcast %83 : vector<1x512xf32> to vector<8x512xf32>
    %85 = arith.mulf %82, %84 : vector<8x512xf32>
    %c48 = arith.constant 48 : index
    %c0_69 = arith.constant 0 : index
    %86 = vector.load %arg13[%c48, %c0_69] : memref<108x512xf32, #tpu.memory_space<vmem>>, vector<8x512xf32>
    tpu.vector_store %arg13[%c48, %c0_69], %85 {strides = array<i32>} : memref<108x512xf32, #tpu.memory_space<vmem>>, vector<8x512xf32>,
    %c496_i32_70 = arith.constant 496 : i32
    %87 = tpu.dynamic_rotate %55 by %c496_i32_70 dim 1 : vector<8x512xf32>, i32 -> vector<8x512xf32>
    %c7_71 = arith.constant 7 : index
    %c0_72 = arith.constant 0 : index
    %88 = vector.load %arg2[%c7_71, %c0_72] : memref<9x512xf32, #tpu.memory_space<vmem>>, vector<1x512xf32>
    %89 = vector.broadcast %88 : vector<1x512xf32> to vector<8x512xf32>
    %90 = arith.mulf %87, %89 : vector<8x512xf32>
    %c56 = arith.constant 56 : index
    %c0_73 = arith.constant 0 : index
    %91 = vector.load %arg13[%c56, %c0_73] : memref<108x512xf32, #tpu.memory_space<vmem>>, vector<8x512xf32>
    tpu.vector_store %arg13[%c56, %c0_73], %90 {strides = array<i32>} : memref<108x512xf32, #tpu.memory_space<vmem>>, vector<8x512xf32>,
    %c495_i32_74 = arith.constant 495 : i32
    %92 = tpu.dynamic_rotate %55 by %c495_i32_74 dim 1 : vector<8x512xf32>, i32 -> vector<8x512xf32>
    %c8_75 = arith.constant 8 : index
    %c0_76 = arith.constant 0 : index
    %93 = vector.load %arg2[%c8_75, %c0_76] : memref<9x512xf32, #tpu.memory_space<vmem>>, vector<1x512xf32>
    %94 = vector.broadcast %93 : vector<1x512xf32> to vector<8x512xf32>
    %95 = arith.mulf %92, %94 : vector<8x512xf32>
    %c64 = arith.constant 64 : index
    %c0_77 = arith.constant 0 : index
    %96 = vector.load %arg13[%c64, %c0_77] : memref<108x512xf32, #tpu.memory_space<vmem>>, vector<8x512xf32>
    tpu.vector_store %arg13[%c64, %c0_77], %95 {strides = array<i32>} : memref<108x512xf32, #tpu.memory_space<vmem>>, vector<8x512xf32>,
    %c0_78 = arith.constant 0 : index
    %c0_79 = arith.constant 0 : index
    %97 = vector.load %arg13[%c0_78, %c0_79] : memref<108x512xf32, #tpu.memory_space<vmem>>, vector<72x512xf32>
    %cst_80 = arith.constant dense<0.000000e+00> : vector<4x512xf32>
    %98 = tpu.matmul %53, %97, %cst_80 {dimension_numbers = #tpu.dot_dimension_numbers<[1], [0], [0], [1], [0, 0, 1, 1], [], []>} : vector<4x72xf32>, vector<72x512xf32>, vector<4x512xf32> -> vector<4x512xf32>
    %99 = vector.broadcast %54 : vector<4x1xf32> to vector<4x512xf32>
    %100 = arith.addf %98, %99 : vector<4x512xf32>
    %cst_81 = arith.constant 0.000000e+00 : f32
    %101 = vector.broadcast %cst_81 : f32 to vector<4x512xf32>
    %102 = arith.maximumf %100, %101 : vector<4x512xf32>
    %c8_82 = arith.constant 8 : index
    %c0_83 = arith.constant 0 : index
    %103 = vector.load %arg12[%c8_82, %c0_83] : memref<16x512xf32, #tpu.memory_space<vmem>>, vector<4x512xf32>
    tpu.vector_store %arg12[%c8_82, %c0_83], %102 {strides = array<i32>} : memref<16x512xf32, #tpu.memory_space<vmem>>, vector<4x512xf32>,
    %c0_84 = arith.constant 0 : index
    %c0_85 = arith.constant 0 : index
    %104 = vector.load %arg7[%c0_84, %c0_85] : memref<4x108xf32, #tpu.memory_space<vmem>>, vector<4x108xf32>
    %c0_86 = arith.constant 0 : index
    %c0_87 = arith.constant 0 : index
    %105 = vector.load %arg8[%c0_86, %c0_87] : memref<4x1xf32, #tpu.memory_space<vmem>>, vector<4x1xf32>
    %c0_88 = arith.constant 0 : index
    %c0_89 = arith.constant 0 : index
    %106 = vector.load %arg12[%c0_88, %c0_89] : memref<16x512xf32, #tpu.memory_space<vmem>>, vector<12x512xf32>
    %c17_i32_90 = arith.constant 17 : i32
    %107 = tpu.dynamic_rotate %106 by %c17_i32_90 dim 1 : vector<12x512xf32>, i32 -> vector<12x512xf32>
    %c0_91 = arith.constant 0 : index
    %c0_92 = arith.constant 0 : index
    %108 = vector.load %arg2[%c0_91, %c0_92] : memref<9x512xf32, #tpu.memory_space<vmem>>, vector<1x512xf32>
    %109 = vector.broadcast %108 : vector<1x512xf32> to vector<12x512xf32>
    %110 = arith.mulf %107, %109 : vector<12x512xf32>
    %c0_93 = arith.constant 0 : index
    %c0_94 = arith.constant 0 : index
    %111 = vector.load %arg13[%c0_93, %c0_94] : memref<108x512xf32, #tpu.memory_space<vmem>>, vector<12x512xf32>
    tpu.vector_store %arg13[%c0_93, %c0_94], %110 {strides = array<i32>} : memref<108x512xf32, #tpu.memory_space<vmem>>, vector<12x512xf32>,
    %c16_i32_95 = arith.constant 16 : i32
    %112 = tpu.dynamic_rotate %106 by %c16_i32_95 dim 1 : vector<12x512xf32>, i32 -> vector<12x512xf32>
    %c1_96 = arith.constant 1 : index
    %c0_97 = arith.constant 0 : index
    %113 = vector.load %arg2[%c1_96, %c0_97] : memref<9x512xf32, #tpu.memory_space<vmem>>, vector<1x512xf32>
    %114 = vector.broadcast %113 : vector<1x512xf32> to vector<12x512xf32>
    %115 = arith.mulf %112, %114 : vector<12x512xf32>
    %c12_98 = arith.constant 12 : index
    %c0_99 = arith.constant 0 : index
    %116 = vector.load %arg13[%c12_98, %c0_99] : memref<108x512xf32, #tpu.memory_space<vmem>>, vector<12x512xf32>
    tpu.vector_store %arg13[%c12_98, %c0_99], %115 {strides = array<i32>} : memref<108x512xf32, #tpu.memory_space<vmem>>, vector<12x512xf32>,
    %c15_i32_100 = arith.constant 15 : i32
    %117 = tpu.dynamic_rotate %106 by %c15_i32_100 dim 1 : vector<12x512xf32>, i32 -> vector<12x512xf32>
    %c2_101 = arith.constant 2 : index
    %c0_102 = arith.constant 0 : index
    %118 = vector.load %arg2[%c2_101, %c0_102] : memref<9x512xf32, #tpu.memory_space<vmem>>, vector<1x512xf32>
    %119 = vector.broadcast %118 : vector<1x512xf32> to vector<12x512xf32>
    %120 = arith.mulf %117, %119 : vector<12x512xf32>
    %c24_103 = arith.constant 24 : index
    %c0_104 = arith.constant 0 : index
    %121 = vector.load %arg13[%c24_103, %c0_104] : memref<108x512xf32, #tpu.memory_space<vmem>>, vector<12x512xf32>
    tpu.vector_store %arg13[%c24_103, %c0_104], %120 {strides = array<i32>} : memref<108x512xf32, #tpu.memory_space<vmem>>, vector<12x512xf32>,
    %c1_i32_105 = arith.constant 1 : i32
    %122 = tpu.dynamic_rotate %106 by %c1_i32_105 dim 1 : vector<12x512xf32>, i32 -> vector<12x512xf32>
    %c3_106 = arith.constant 3 : index
    %c0_107 = arith.constant 0 : index
    %123 = vector.load %arg2[%c3_106, %c0_107] : memref<9x512xf32, #tpu.memory_space<vmem>>, vector<1x512xf32>
    %124 = vector.broadcast %123 : vector<1x512xf32> to vector<12x512xf32>
    %125 = arith.mulf %122, %124 : vector<12x512xf32>
    %c36 = arith.constant 36 : index
    %c0_108 = arith.constant 0 : index
    %126 = vector.load %arg13[%c36, %c0_108] : memref<108x512xf32, #tpu.memory_space<vmem>>, vector<12x512xf32>
    tpu.vector_store %arg13[%c36, %c0_108], %125 {strides = array<i32>} : memref<108x512xf32, #tpu.memory_space<vmem>>, vector<12x512xf32>,
    %c48_109 = arith.constant 48 : index
    %c0_110 = arith.constant 0 : index
    %127 = vector.load %arg13[%c48_109, %c0_110] : memref<108x512xf32, #tpu.memory_space<vmem>>, vector<12x512xf32>
    tpu.vector_store %arg13[%c48_109, %c0_110], %106 {strides = array<i32>} : memref<108x512xf32, #tpu.memory_space<vmem>>, vector<12x512xf32>,
    %c511_i32_111 = arith.constant 511 : i32
    %128 = tpu.dynamic_rotate %106 by %c511_i32_111 dim 1 : vector<12x512xf32>, i32 -> vector<12x512xf32>
    %c5_112 = arith.constant 5 : index
    %c0_113 = arith.constant 0 : index
    %129 = vector.load %arg2[%c5_112, %c0_113] : memref<9x512xf32, #tpu.memory_space<vmem>>, vector<1x512xf32>
    %130 = vector.broadcast %129 : vector<1x512xf32> to vector<12x512xf32>
    %131 = arith.mulf %128, %130 : vector<12x512xf32>
    %c60 = arith.constant 60 : index
    %c0_114 = arith.constant 0 : index
    %132 = vector.load %arg13[%c60, %c0_114] : memref<108x512xf32, #tpu.memory_space<vmem>>, vector<12x512xf32>
    tpu.vector_store %arg13[%c60, %c0_114], %131 {strides = array<i32>} : memref<108x512xf32, #tpu.memory_space<vmem>>, vector<12x512xf32>,
    %c497_i32_115 = arith.constant 497 : i32
    %133 = tpu.dynamic_rotate %106 by %c497_i32_115 dim 1 : vector<12x512xf32>, i32 -> vector<12x512xf32>
    %c6_116 = arith.constant 6 : index
    %c0_117 = arith.constant 0 : index
    %134 = vector.load %arg2[%c6_116, %c0_117] : memref<9x512xf32, #tpu.memory_space<vmem>>, vector<1x512xf32>
    %135 = vector.broadcast %134 : vector<1x512xf32> to vector<12x512xf32>
    %136 = arith.mulf %133, %135 : vector<12x512xf32>
    %c72 = arith.constant 72 : index
    %c0_118 = arith.constant 0 : index
    %137 = vector.load %arg13[%c72, %c0_118] : memref<108x512xf32, #tpu.memory_space<vmem>>, vector<12x512xf32>
    tpu.vector_store %arg13[%c72, %c0_118], %136 {strides = array<i32>} : memref<108x512xf32, #tpu.memory_space<vmem>>, vector<12x512xf32>,
    %c496_i32_119 = arith.constant 496 : i32
    %138 = tpu.dynamic_rotate %106 by %c496_i32_119 dim 1 : vector<12x512xf32>, i32 -> vector<12x512xf32>
    %c7_120 = arith.constant 7 : index
    %c0_121 = arith.constant 0 : index
    %139 = vector.load %arg2[%c7_120, %c0_121] : memref<9x512xf32, #tpu.memory_space<vmem>>, vector<1x512xf32>
    %140 = vector.broadcast %139 : vector<1x512xf32> to vector<12x512xf32>
    %141 = arith.mulf %138, %140 : vector<12x512xf32>
    %c84 = arith.constant 84 : index
    %c0_122 = arith.constant 0 : index
    %142 = vector.load %arg13[%c84, %c0_122] : memref<108x512xf32, #tpu.memory_space<vmem>>, vector<12x512xf32>
    tpu.vector_store %arg13[%c84, %c0_122], %141 {strides = array<i32>} : memref<108x512xf32, #tpu.memory_space<vmem>>, vector<12x512xf32>,
    %c495_i32_123 = arith.constant 495 : i32
    %143 = tpu.dynamic_rotate %106 by %c495_i32_123 dim 1 : vector<12x512xf32>, i32 -> vector<12x512xf32>
    %c8_124 = arith.constant 8 : index
    %c0_125 = arith.constant 0 : index
    %144 = vector.load %arg2[%c8_124, %c0_125] : memref<9x512xf32, #tpu.memory_space<vmem>>, vector<1x512xf32>
    %145 = vector.broadcast %144 : vector<1x512xf32> to vector<12x512xf32>
    %146 = arith.mulf %143, %145 : vector<12x512xf32>
    %c96 = arith.constant 96 : index
    %c0_126 = arith.constant 0 : index
    %147 = vector.load %arg13[%c96, %c0_126] : memref<108x512xf32, #tpu.memory_space<vmem>>, vector<12x512xf32>
    tpu.vector_store %arg13[%c96, %c0_126], %146 {strides = array<i32>} : memref<108x512xf32, #tpu.memory_space<vmem>>, vector<12x512xf32>,
    %c0_127 = arith.constant 0 : index
    %c0_128 = arith.constant 0 : index
    %148 = vector.load %arg13[%c0_127, %c0_128] : memref<108x512xf32, #tpu.memory_space<vmem>>, vector<108x512xf32>
    %cst_129 = arith.constant dense<0.000000e+00> : vector<4x512xf32>
    %149 = tpu.matmul %104, %148, %cst_129 {dimension_numbers = #tpu.dot_dimension_numbers<[1], [0], [0], [1], [0, 0, 1, 1], [], []>} : vector<4x108xf32>, vector<108x512xf32>, vector<4x512xf32> -> vector<4x512xf32>
    %150 = vector.broadcast %105 : vector<4x1xf32> to vector<4x512xf32>
    %151 = arith.addf %149, %150 : vector<4x512xf32>
    %cst_130 = arith.constant 0.000000e+00 : f32
    %152 = vector.broadcast %cst_130 : f32 to vector<4x512xf32>
    %153 = arith.maximumf %151, %152 : vector<4x512xf32>
    %c12_131 = arith.constant 12 : index
    %c0_132 = arith.constant 0 : index
    %154 = vector.load %arg12[%c12_131, %c0_132] : memref<16x512xf32, #tpu.memory_space<vmem>>, vector<4x512xf32>
    tpu.vector_store %arg12[%c12_131, %c0_132], %153 {strides = array<i32>} : memref<16x512xf32, #tpu.memory_space<vmem>>, vector<4x512xf32>,
    %c0_133 = arith.constant 0 : index
    %c0_134 = arith.constant 0 : index
    %155 = vector.load %arg9[%c0_133, %c0_134] : memref<4x16xf32, #tpu.memory_space<vmem>>, vector<4x16xf32>
    %c0_135 = arith.constant 0 : index
    %c0_136 = arith.constant 0 : index
    %156 = vector.load %arg12[%c0_135, %c0_136] : memref<16x512xf32, #tpu.memory_space<vmem>>, vector<16x512xf32>
    %cst_137 = arith.constant dense<0.000000e+00> : vector<4x512xf32>
    %157 = tpu.matmul %155, %156, %cst_137 {dimension_numbers = #tpu.dot_dimension_numbers<[1], [0], [0], [1], [0, 0, 1, 1], [], []>} : vector<4x16xf32>, vector<16x512xf32>, vector<4x512xf32> -> vector<4x512xf32>
    %c0_138 = arith.constant 0 : index
    %c0_139 = arith.constant 0 : index
    %158 = vector.load %arg10[%c0_138, %c0_139] : memref<4x1xf32, #tpu.memory_space<vmem>>, vector<4x1xf32>
    %159 = vector.broadcast %158 : vector<4x1xf32> to vector<4x512xf32>
    %160 = arith.addf %157, %159 : vector<4x512xf32>
    %c0_140 = arith.constant 0 : index
    %c0_141 = arith.constant 0 : index
    %161 = vector.load %arg11[%c0_140, %c0_141] : memref<4x512xf32, #tpu.memory_space<vmem>>, vector<4x512xf32>
    tpu.vector_store %arg11[%c0_140, %c0_141], %160 {strides = array<i32>} : memref<4x512xf32, #tpu.memory_space<vmem>>, vector<4x512xf32>,
    return
  }
  func.func @transform_0(%arg0: i32) -> (i32, i32) {
    %c0_i32 = arith.constant 0 : i32
    %c0_i32_0 = arith.constant 0 : i32
    %c0_i32_1 = arith.constant 0 : i32
    return %c0_i32, %c0_i32_0 : i32, i32
  }
  func.func @transform_1(%arg0: i32) -> (i32, i32) {
    %c0_i32 = arith.constant 0 : i32
    %c0_i32_0 = arith.constant 0 : i32
    %c0_i32_1 = arith.constant 0 : i32
    return %c0_i32, %c0_i32_0 : i32, i32
  }
  func.func @transform_2(%arg0: i32) -> (i32, i32) {
    %c0_i32 = arith.constant 0 : i32
    %c0_i32_0 = arith.constant 0 : i32
    %c0_i32_1 = arith.constant 0 : i32
    return %c0_i32, %c0_i32_0 : i32, i32
  }
  func.func @transform_3(%arg0: i32) -> (i32, i32) {
    %c0_i32 = arith.constant 0 : i32
    %c0_i32_0 = arith.constant 0 : i32
    %c0_i32_1 = arith.constant 0 : i32
    return %c0_i32, %c0_i32_0 : i32, i32
  }
  func.func @transform_4(%arg0: i32) -> (i32, i32) {
    %c0_i32 = arith.constant 0 : i32
    %c0_i32_0 = arith.constant 0 : i32
    %c0_i32_1 = arith.constant 0 : i32
    return %c0_i32, %c0_i32_0 : i32, i32
  }
  func.func @transform_5(%arg0: i32) -> (i32, i32) {
    %c0_i32 = arith.constant 0 : i32
    %c0_i32_0 = arith.constant 0 : i32
    %c0_i32_1 = arith.constant 0 : i32
    return %c0_i32, %c0_i32_0 : i32, i32
  }
  func.func @transform_6(%arg0: i32) -> (i32, i32) {
    %c0_i32 = arith.constant 0 : i32
    %c0_i32_0 = arith.constant 0 : i32
    %c0_i32_1 = arith.constant 0 : i32
    return %c0_i32, %c0_i32_0 : i32, i32
  }
  func.func @transform_7(%arg0: i32) -> (i32, i32) {
    %c0_i32 = arith.constant 0 : i32
    %c0_i32_0 = arith.constant 0 : i32
    %c0_i32_1 = arith.constant 0 : i32
    return %c0_i32, %c0_i32_0 : i32, i32
  }
  func.func @transform_8(%arg0: i32) -> (i32, i32) {
    %c0_i32 = arith.constant 0 : i32
    %c0_i32_0 = arith.constant 0 : i32
    %c0_i32_1 = arith.constant 0 : i32
    return %c0_i32, %c0_i32_0 : i32, i32
  }
  func.func @transform_9(%arg0: i32) -> (i32, i32) {
    %c0_i32 = arith.constant 0 : i32
    %c0_i32_0 = arith.constant 0 : i32
    %c0_i32_1 = arith.constant 0 : i32
    return %c0_i32, %c0_i32_0 : i32, i32
  }
  func.func @transform_10(%arg0: i32) -> (i32, i32) {
    %c0_i32 = arith.constant 0 : i32
    %c0_i32_0 = arith.constant 0 : i32
    %c0_i32_1 = arith.constant 0 : i32
    return %c0_i32, %c0_i32_0 : i32, i32
  }
}

</mosaic_0001>

<llo_original>
// kernel: tpu_custom_call.1
$region0: #{tpu_custom_call.1}
  #allocation0 [shape = 'u32[]', space=smem, size = 0x4, offset = 0x4, fixed_abs, tag = 'smem constant byte address 0x4 - core index']
  #allocation1 [shape = 'u32[144,128]{1,0:T(1,128)}', space=vmem, size = 0x12000, scoped, tag = 'internal scratch']
  #allocation2 [shape = 'f32[16,512]{1,0:T(8,128)}', space=vmem, size = 0x8000, scoped, tag = 'scratch operand']
  #allocation3 [shape = 'f32[108,512]{1,0:T(8,128)}', space=vmem, size = 0x38000, scoped, tag = 'scratch operand']
  %s0 = inlined_call_operand.vmem [shape: f32[4,512], index: 0, kind: input, shape index: {}]
  %s1 = inlined_call_operand.hbm [shape: f32[9,512], index: 1, kind: input, shape index: {}]
  %s2 = inlined_call_operand.vmem [shape: f32[4,36], index: 2, kind: input, shape index: {}]
  %s3 = inlined_call_operand.vmem [shape: f32[4,1], index: 3, kind: input, shape index: {}]
  %s4 = inlined_call_operand.vmem [shape: f32[4,72], index: 4, kind: input, shape index: {}]
  %s5 = inlined_call_operand.vmem [shape: f32[4,1], index: 5, kind: input, shape index: {}]
  %s6 = inlined_call_operand.vmem [shape: f32[4,108], index: 6, kind: input, shape index: {}]
  %s7 = inlined_call_operand.vmem [shape: f32[4,1], index: 7, kind: input, shape index: {}]
  %s8 = inlined_call_operand.vmem [shape: f32[4,16], index: 8, kind: input, shape index: {}]
  %s9 = inlined_call_operand.vmem [shape: f32[4,1], index: 9, kind: input, shape index: {}]
  %s10 = inlined_call_operand.hbm [shape: f32[4,512], index: 10, kind: output, shape index: {}]
  %s11 = sld [smem:[#allocation0]]
  $region54: #{tpu_custom_call.1} parent=0
    _
  %s13 = ssub.s32 1, %s11
  %s14 = scalar_select 0, %s13, %s11
  $region1: #{tpu_custom_call.1} parent=0
    #allocation4 [shape = 'u8[32768]{0}', space=vmem, size = 0x8000, scoped, tag = 'input window, operand 1, single buffered']
    #allocation5 [shape = 's32[1]{0}', space=sflag, size = 0x4, scoped, tag = 'scoped memory for tpu_custom_call.1']
    #allocation6 [shape = 's32[1]{0}', space=sflag, size = 0x4, scoped, tag = 'scoped memory for tpu_custom_call.1']
    #allocation7 [shape = 'u8[8192]{0}', space=vmem, size = 0x2000, scoped, tag = 'output window, operand 0, single buffered']
    %15 = vsyncpa [#allocation5], 0
    %16 = vsyncpa [#allocation6], 0
    // Predicated region
    $region2: #{tpu_custom_call.1} parent=1 // pred_check
      _
    $region3: #{tpu_custom_call.1} parent=1 // pred_check_branch
      %18 = sbr.rel (0) target = $region5
    $region4: #{tpu_custom_call.1} parent=1 // pred_region
      _
    $region5: #{tpu_custom_call.1} parent=1 // pred_fallthru
      _
    // Predicated region
    $region6: #{tpu_custom_call.1} parent=1 // pred_check
      _
    $region7: #{tpu_custom_call.1} parent=1 // pred_check_branch
      %20 = sbr.rel (0) target = $region9
    $region8: #{tpu_custom_call.1} parent=1 // pred_region
      %s22 = ssub.s32 1024, 1024
      %23 = vsyncadd [#allocation5], %s22
      %s24 = sshll.u32 [#allocation4], 4
      %s25 = int_to_ptr.vmem [resolvable:$true] %s24
      %30 = dma.hbm_to_vmem [thread:$0]  %s1, 1024, %s25, [#allocation5], 512, 512, 32
    $region9: #{tpu_custom_call.1} parent=1 // pred_fallthru
      _
    // Predicated region
    $region10: #{tpu_custom_call.1} parent=1 // pred_check
      _
    $region11: #{tpu_custom_call.1} parent=1 // pred_check_branch
      %32 = sbr.rel (0) target = $region13
    $region12: #{tpu_custom_call.1} parent=1 // pred_region
      _
    $region13: #{tpu_custom_call.1} parent=1 // pred_fallthru
      _
    // Predicated region
    $region14: #{tpu_custom_call.1} parent=1 // pred_check
      _
    $region15: #{tpu_custom_call.1} parent=1 // pred_check_branch
      %34 = sbr.rel (0) target = $region17
    $region16: #{tpu_custom_call.1} parent=1 // pred_region
      _
    $region17: #{tpu_custom_call.1} parent=1 // pred_fallthru
      _
    // Predicated region
    $region18: #{tpu_custom_call.1} parent=1 // pred_check
      _
    $region19: #{tpu_custom_call.1} parent=1 // pred_check_branch
      %36 = sbr.rel (0) target = $region21
    $region20: #{tpu_custom_call.1} parent=1 // pred_region
      _
    $region21: #{tpu_custom_call.1} parent=1 // pred_fallthru
      _
    // Predicated region
    $region22: #{tpu_custom_call.1} parent=1 // pred_check
      _
    $region23: #{tpu_custom_call.1} parent=1 // pred_check_branch
      %38 = sbr.rel (0) target = $region25
    $region24: #{tpu_custom_call.1} parent=1 // pred_region
      _
    $region25: #{tpu_custom_call.1} parent=1 // pred_fallthru
      _
    // Predicated region
    $region26: #{tpu_custom_call.1} parent=1 // pred_check
      _
    $region27: #{tpu_custom_call.1} parent=1 // pred_check_branch
      %40 = sbr.rel (0) target = $region29
    $region28: #{tpu_custom_call.1} parent=1 // pred_region
      _
    $region29: #{tpu_custom_call.1} parent=1 // pred_fallthru
      _
    // Predicated region
    $region30: #{tpu_custom_call.1} parent=1 // pred_check
      _
    $region31: #{tpu_custom_call.1} parent=1 // pred_check_branch
      %42 = sbr.rel (0) target = $region33
    $region32: #{tpu_custom_call.1} parent=1 // pred_region
      _
    $region33: #{tpu_custom_call.1} parent=1 // pred_fallthru
      _
    // Predicated region
    $region34: #{tpu_custom_call.1} parent=1 // pred_check
      _
    $region35: #{tpu_custom_call.1} parent=1 // pred_check_branch
      %44 = sbr.rel (0) target = $region37
    $region36: #{tpu_custom_call.1} parent=1 // pred_region
      _
    $region37: #{tpu_custom_call.1} parent=1 // pred_fallthru
      _
    // Predicated region
    $region38: #{tpu_custom_call.1} parent=1 // pred_check
      _
    $region39: #{tpu_custom_call.1} parent=1 // pred_check_branch
      %46 = sbr.rel (0) target = $region41
    $region40: #{tpu_custom_call.1} parent=1 // pred_region
      _
    $region41: #{tpu_custom_call.1} parent=1 // pred_fallthru
      _
    // Predicated region
    $region42: #{tpu_custom_call.1} parent=1 // pred_check
      _
    $region43: #{tpu_custom_call.1} parent=1 // pred_check_branch
      %48 = sbr.rel (0) target = $region45
    $region44: #{tpu_custom_call.1} parent=1 // pred_region
      %49 = dma.done [#allocation5], 1024
    $region45: #{tpu_custom_call.1} parent=1 // pred_fallthru
      _
    %v50 = vld [vmem:[%s0] sm:$0xff]
    %v51 = vld [vmem:[%s0 + $0x8] sm:$0xff]
    %v54 = vcombine.high %v50, %v50
    %v55 = vcombine.high %v51, %v51
    %58 = vst [vmem:[#allocation2] sm:$0xf] %v50
    %59 = vst [vmem:[#allocation2 + $0x8] sm:$0xf] %v54
    %60 = vst [vmem:[#allocation2 + $0x10] sm:$0xf] %v51
    %61 = vst [vmem:[#allocation2 + $0x18] sm:$0xf] %v55
    %v62 = vld [vmem:[%s2] sm:$0xf]
    %v63 = vld [vmem:[%s3] sm:$0xf]
    %v64 = vld [vmem:[#allocation2] sm:$0xf]
    %v65 = vld [vmem:[#allocation2 + $0x8] sm:$0xf]
    %v66 = vld [vmem:[#allocation2 + $0x10] sm:$0xf]
    %v67 = vld [vmem:[#allocation2 + $0x18] sm:$0xf]
    %68 = vrot.lane.b32.xlu0 %v64, 17
    %v69 = vpop.permute.xlu0 %68
    %70 = vrot.lane.b32.xlu0 %v65, 17
    %v71 = vpop.permute.xlu0 %70
    %72 = vrot.lane.b32.xlu0 %v66, 17
    %v73 = vpop.permute.xlu0 %72
    %74 = vrot.lane.b32.xlu0 %v67, 17
    %v75 = vpop.permute.xlu0 %74
    %v76 = vlaneseq
    %v77 = vand.u32 %v76, 127
    %vm78 = vcmp.lt.s32.totalorder %v77, 17
    %v79 = vsel %vm78, %v73, %v75
    %v80 = vsel %vm78, %v71, %v73
    %v81 = vsel %vm78, %v69, %v71
    %v82 = vsel %vm78, %v75, %v69
    %v83 = vld [vmem:[#allocation4] ss:$8 sm:$0xf]
    %v85 = vlaneseq
    %v86 = vshrl.u32 %v85, 7
    %v87 = vsub.s32 0, %v86
    %v88 = vrot.slane %v83, %v87
    %v89 = vlaneseq
    %v90 = vshrl.u32 %v89, 7
    %v91 = vsub.s32 1, %v90
    %v92 = vrot.slane %v83, %v91
    %v93 = vlaneseq
    %v94 = vshrl.u32 %v93, 7
    %v95 = vsub.s32 2, %v94
    %v96 = vrot.slane %v83, %v95
    %v97 = vlaneseq
    %v98 = vshrl.u32 %v97, 7
    %v99 = vsub.s32 3, %v98
    %v100 = vrot.slane %v83, %v99
    %v105 = vmul.f32 %v82, %v88
    %v106 = vmul.f32 %v81, %v92
    %v107 = vmul.f32 %v80, %v96
    %v108 = vmul.f32 %v79, %v100
    %109 = vst [vmem:[#allocation3] sm:$0xf] %v105
    %110 = vst [vmem:[#allocation3 + $0x8] sm:$0xf] %v106
    %111 = vst [vmem:[#allocation3 + $0x10] sm:$0xf] %v107
    %112 = vst [vmem:[#allocation3 + $0x18] sm:$0xf] %v108
    %113 = vrot.lane.b32.xlu0 %v64, 16
    %v114 = vpop.permute.xlu0 %113
    %115 = vrot.lane.b32.xlu0 %v65, 16
    %v116 = vpop.permute.xlu0 %115
    %117 = vrot.lane.b32.xlu0 %v66, 16
    %v118 = vpop.permute.xlu0 %117
    %119 = vrot.lane.b32.xlu0 %v67, 16
    %v120 = vpop.permute.xlu0 %119
    %vm121 = vcmp.lt.s32.totalorder %v77, 16
    %v122 = vsel %vm121, %v118, %v120
    %v123 = vsel %vm121, %v116, %v118
    %v124 = vsel %vm121, %v114, %v116
    %v125 = vsel %vm121, %v120, %v114
    %s126 = scalar_lea.vmem [#allocation4], 1
    %v127 = vld [vmem:[%s126] ss:$8 sm:$0xf]
    %v129 = vlaneseq
    %v130 = vshrl.u32 %v129, 7
    %v131 = vsub.s32 0, %v130
    %v132 = vrot.slane %v127, %v131
    %v133 = vlaneseq
    %v134 = vshrl.u32 %v133, 7
    %v135 = vsub.s32 1, %v134
    %v136 = vrot.slane %v127, %v135
    %v137 = vlaneseq
    %v138 = vshrl.u32 %v137, 7
    %v139 = vsub.s32 2, %v138
    %v140 = vrot.slane %v127, %v139
    %v141 = vlaneseq
    %v142 = vshrl.u32 %v141, 7
    %v143 = vsub.s32 3, %v142
    %v144 = vrot.slane %v127, %v143
    %v149 = vmul.f32 %v125, %v132
    %v150 = vmul.f32 %v124, %v136
    %v151 = vmul.f32 %v123, %v140
    %v152 = vmul.f32 %v122, %v144
    %v157 = vrot.slane %v149, 4
    %v158 = vrot.slane %v150, 4
    %v159 = vrot.slane %v151, 4
    %v160 = vrot.slane %v152, 4
    %165 = vst [vmem:[#allocation3] sm:$0xf0] %v157
    %166 = vst [vmem:[#allocation3 + $0x8] sm:$0xf0] %v158
    %167 = vst [vmem:[#allocation3 + $0x10] sm:$0xf0] %v159
    %168 = vst [vmem:[#allocation3 + $0x18] sm:$0xf0] %v160
    %169 = vrot.lane.b32.xlu0 %v64, 15
    %v170 = vpop.permute.xlu0 %169
    %171 = vrot.lane.b32.xlu0 %v65, 15
    %v172 = vpop.permute.xlu0 %171
    %173 = vrot.lane.b32.xlu0 %v66, 15
    %v174 = vpop.permute.xlu0 %173
    %175 = vrot.lane.b32.xlu0 %v67, 15
    %v176 = vpop.permute.xlu0 %175
    %vm177 = vcmp.lt.s32.totalorder %v77, 15
    %v178 = vsel %vm177, %v174, %v176
    %v179 = vsel %vm177, %v172, %v174
    %v180 = vsel %vm177, %v170, %v172
    %v181 = vsel %vm177, %v176, %v170
    %s182 = scalar_lea.vmem [#allocation4], 2
    %v183 = vld [vmem:[%s182] ss:$8 sm:$0xf]
    %v185 = vlaneseq
    %v186 = vshrl.u32 %v185, 7
    %v187 = vsub.s32 0, %v186
    %v188 = vrot.slane %v183, %v187
    %v189 = vlaneseq
    %v190 = vshrl.u32 %v189, 7
    %v191 = vsub.s32 1, %v190
    %v192 = vrot.slane %v183, %v191
    %v193 = vlaneseq
    %v194 = vshrl.u32 %v193, 7
    %v195 = vsub.s32 2, %v194
    %v196 = vrot.slane %v183, %v195
    %v197 = vlaneseq
    %v198 = vshrl.u32 %v197, 7
    %v199 = vsub.s32 3, %v198
    %v200 = vrot.slane %v183, %v199
    %v205 = vmul.f32 %v181, %v188
    %v206 = vmul.f32 %v180, %v192
    %v207 = vmul.f32 %v179, %v196
    %v208 = vmul.f32 %v178, %v200
    %209 = vst [vmem:[#allocation3 + $0x20] sm:$0xf] %v205
    %210 = vst [vmem:[#allocation3 + $0x28] sm:$0xf] %v206
    %211 = vst [vmem:[#allocation3 + $0x30] sm:$0xf] %v207
    %212 = vst [vmem:[#allocation3 + $0x38] sm:$0xf] %v208
    %213 = vrot.lane.b32.xlu0 %v64, 1
    %v214 = vpop.permute.xlu0 %213
    %215 = vrot.lane.b32.xlu0 %v65, 1
    %v216 = vpop.permute.xlu0 %215
    %217 = vrot.lane.b32.xlu0 %v66, 1
    %v218 = vpop.permute.xlu0 %217
    %219 = vrot.lane.b32.xlu0 %v67, 1
    %v220 = vpop.permute.xlu0 %219
    %vm221 = vcmp.lt.s32.totalorder %v77, 1
    %v222 = vsel %vm221, %v218, %v220
    %v223 = vsel %vm221, %v216, %v218
    %v224 = vsel %vm221, %v214, %v216
    %v225 = vsel %vm221, %v220, %v214
    %s226 = scalar_lea.vmem [#allocation4], 3
    %v227 = vld [vmem:[%s226] ss:$8 sm:$0xf]
    %v229 = vlaneseq
    %v230 = vshrl.u32 %v229, 7
    %v231 = vsub.s32 0, %v230
    %v232 = vrot.slane %v227, %v231
    %v233 = vlaneseq
    %v234 = vshrl.u32 %v233, 7
    %v235 = vsub.s32 1, %v234
    %v236 = vrot.slane %v227, %v235
    %v237 = vlaneseq
    %v238 = vshrl.u32 %v237, 7
    %v239 = vsub.s32 2, %v238
    %v240 = vrot.slane %v227, %v239
    %v241 = vlaneseq
    %v242 = vshrl.u32 %v241, 7
    %v243 = vsub.s32 3, %v242
    %v244 = vrot.slane %v227, %v243
    %v249 = vmul.f32 %v225, %v232
    %v250 = vmul.f32 %v224, %v236
    %v251 = vmul.f32 %v223, %v240
    %v252 = vmul.f32 %v222, %v244
    %v257 = vrot.slane %v249, 4
    %v258 = vrot.slane %v250, 4
    %v259 = vrot.slane %v251, 4
    %v260 = vrot.slane %v252, 4
    %265 = vst [vmem:[#allocation3 + $0x20] sm:$0xf0] %v257
    %266 = vst [vmem:[#allocation3 + $0x28] sm:$0xf0] %v258
    %267 = vst [vmem:[#allocation3 + $0x30] sm:$0xf0] %v259
    %268 = vst [vmem:[#allocation3 + $0x38] sm:$0xf0] %v260
    %269 = vst [vmem:[#allocation3 + $0x40] sm:$0xf] %v64
    %270 = vst [vmem:[#allocation3 + $0x48] sm:$0xf] %v65
    %271 = vst [vmem:[#allocation3 + $0x50] sm:$0xf] %v66
    %272 = vst [vmem:[#allocation3 + $0x58] sm:$0xf] %v67
    %273 = vrot.lane.b32.xlu0 %v64, 127
    %v274 = vpop.permute.xlu0 %273
    %275 = vrot.lane.b32.xlu0 %v65, 127
    %v276 = vpop.permute.xlu0 %275
    %277 = vrot.lane.b32.xlu0 %v66, 127
    %v278 = vpop.permute.xlu0 %277
    %279 = vrot.lane.b32.xlu0 %v67, 127
    %v280 = vpop.permute.xlu0 %279
    %vm281 = vcmp.lt.s32.totalorder %v77, 127
    %v282 = vsel %vm281, %v278, %v280
    %v283 = vsel %vm281, %v276, %v278
    %v284 = vsel %vm281, %v274, %v276
    %v285 = vsel %vm281, %v280, %v274
    %s286 = scalar_lea.vmem [#allocation4], 5
    %v287 = vld [vmem:[%s286] ss:$8 sm:$0xf]
    %v289 = vlaneseq
    %v290 = vshrl.u32 %v289, 7
    %v291 = vsub.s32 0, %v290
    %v292 = vrot.slane %v287, %v291
    %v293 = vlaneseq
    %v294 = vshrl.u32 %v293, 7
    %v295 = vsub.s32 1, %v294
    %v296 = vrot.slane %v287, %v295
    %v297 = vlaneseq
    %v298 = vshrl.u32 %v297, 7
    %v299 = vsub.s32 2, %v298
    %v300 = vrot.slane %v287, %v299
    %v301 = vlaneseq
    %v302 = vshrl.u32 %v301, 7
    %v303 = vsub.s32 3, %v302
    %v304 = vrot.slane %v287, %v303
    %v309 = vmul.f32 %v284, %v292
    %v310 = vmul.f32 %v283, %v296
    %v311 = vmul.f32 %v282, %v300
    %v312 = vmul.f32 %v285, %v304
    %v317 = vrot.slane %v309, 4
    %v318 = vrot.slane %v310, 4
    %v319 = vrot.slane %v311, 4
    %v320 = vrot.slane %v312, 4
    %325 = vst [vmem:[#allocation3 + $0x40] sm:$0xf0] %v317
    %326 = vst [vmem:[#allocation3 + $0x48] sm:$0xf0] %v318
    %327 = vst [vmem:[#allocation3 + $0x50] sm:$0xf0] %v319
    %328 = vst [vmem:[#allocation3 + $0x58] sm:$0xf0] %v320
    %329 = vrot.lane.b32.xlu0 %v64, 113
    %v330 = vpop.permute.xlu0 %329
    %331 = vrot.lane.b32.xlu0 %v65, 113
    %v332 = vpop.permute.xlu0 %331
    %333 = vrot.lane.b32.xlu0 %v66, 113
    %v334 = vpop.permute.xlu0 %333
    %335 = vrot.lane.b32.xlu0 %v67, 113
    %v336 = vpop.permute.xlu0 %335
    %vm337 = vcmp.lt.s32.totalorder %v77, 113
    %v338 = vsel %vm337, %v334, %v336
    %v339 = vsel %vm337, %v332, %v334
    %v340 = vsel %vm337, %v330, %v332
    %v341 = vsel %vm337, %v336, %v330
    %s342 = scalar_lea.vmem [#allocation4], 6
    %v343 = vld [vmem:[%s342] ss:$8 sm:$0xf]
    %v345 = vlaneseq
    %v346 = vshrl.u32 %v345, 7
    %v347 = vsub.s32 0, %v346
    %v348 = vrot.slane %v343, %v347
    %v349 = vlaneseq
    %v350 = vshrl.u32 %v349, 7
    %v351 = vsub.s32 1, %v350
    %v352 = vrot.slane %v343, %v351
    %v353 = vlaneseq
    %v354 = vshrl.u32 %v353, 7
    %v355 = vsub.s32 2, %v354
    %v356 = vrot.slane %v343, %v355
    %v357 = vlaneseq
    %v358 = vshrl.u32 %v357, 7
    %v359 = vsub.s32 3, %v358
    %v360 = vrot.slane %v343, %v359
    %v365 = vmul.f32 %v340, %v348
    %v366 = vmul.f32 %v339, %v352
    %v367 = vmul.f32 %v338, %v356
    %v368 = vmul.f32 %v341, %v360
    %369 = vst [vmem:[#allocation3 + $0x60] sm:$0xf] %v365
    %370 = vst [vmem:[#allocation3 + $0x68] sm:$0xf] %v366
    %371 = vst [vmem:[#allocation3 + $0x70] sm:$0xf] %v367
    %372 = vst [vmem:[#allocation3 + $0x78] sm:$0xf] %v368
    %373 = vrot.lane.b32.xlu0 %v64, 112
    %v374 = vpop.permute.xlu0 %373
    %375 = vrot.lane.b32.xlu0 %v65, 112
    %v376 = vpop.permute.xlu0 %375
    %377 = vrot.lane.b32.xlu0 %v66, 112
    %v378 = vpop.permute.xlu0 %377
    %379 = vrot.lane.b32.xlu0 %v67, 112
    %v380 = vpop.permute.xlu0 %379
    %vm381 = vcmp.lt.s32.totalorder %v77, 112
    %v382 = vsel %vm381, %v378, %v380
    %v383 = vsel %vm381, %v376, %v378
    %v384 = vsel %vm381, %v374, %v376
    %v385 = vsel %vm381, %v380, %v374
    %s386 = scalar_lea.vmem [#allocation4], 7
    %v387 = vld [vmem:[%s386] ss:$8 sm:$0xf]
    %v389 = vlaneseq
    %v390 = vshrl.u32 %v389, 7
    %v391 = vsub.s32 0, %v390
    %v392 = vrot.slane %v387, %v391
    %v393 = vlaneseq
    %v394 = vshrl.u32 %v393, 7
    %v395 = vsub.s32 1, %v394
    %v396 = vrot.slane %v387, %v395
    %v397 = vlaneseq
    %v398 = vshrl.u32 %v397, 7
    %v399 = vsub.s32 2, %v398
    %v400 = vrot.slane %v387, %v399
    %v401 = vlaneseq
    %v402 = vshrl.u32 %v401, 7
    %v403 = vsub.s32 3, %v402
    %v404 = vrot.slane %v387, %v403
    %v409 = vmul.f32 %v384, %v392
    %v410 = vmul.f32 %v383, %v396
    %v411 = vmul.f32 %v382, %v400
    %v412 = vmul.f32 %v385, %v404
    %v417 = vrot.slane %v409, 4
    %v418 = vrot.slane %v410, 4
    %v419 = vrot.slane %v411, 4
    %v420 = vrot.slane %v412, 4
    %425 = vst [vmem:[#allocation3 + $0x60] sm:$0xf0] %v417
    %426 = vst [vmem:[#allocation3 + $0x68] sm:$0xf0] %v418
    %427 = vst [vmem:[#allocation3 + $0x70] sm:$0xf0] %v419
    %428 = vst [vmem:[#allocation3 + $0x78] sm:$0xf0] %v420
    %429 = vrot.lane.b32.xlu0 %v64, 111
    %v430 = vpop.permute.xlu0 %429
    %431 = vrot.lane.b32.xlu0 %v65, 111
    %v432 = vpop.permute.xlu0 %431
    %433 = vrot.lane.b32.xlu0 %v66, 111
    %v434 = vpop.permute.xlu0 %433
    %435 = vrot.lane.b32.xlu0 %v67, 111
    %v436 = vpop.permute.xlu0 %435
    %vm437 = vcmp.lt.s32.totalorder %v77, 111
    %v438 = vsel %vm437, %v434, %v436
    %v439 = vsel %vm437, %v432, %v434
    %v440 = vsel %vm437, %v430, %v432
    %v441 = vsel %vm437, %v436, %v430
    %s442 = scalar_lea.vmem [#allocation4], 32
    %v443 = vld [vmem:[%s442] ss:$8 sm:$0xf]
    %v445 = vlaneseq
    %v446 = vshrl.u32 %v445, 7
    %v447 = vsub.s32 0, %v446
    %v448 = vrot.slane %v443, %v447
    %v449 = vlaneseq
    %v450 = vshrl.u32 %v449, 7
    %v451 = vsub.s32 1, %v450
    %v452 = vrot.slane %v443, %v451
    %v453 = vlaneseq
    %v454 = vshrl.u32 %v453, 7
    %v455 = vsub.s32 2, %v454
    %v456 = vrot.slane %v443, %v455
    %v457 = vlaneseq
    %v458 = vshrl.u32 %v457, 7
    %v459 = vsub.s32 3, %v458
    %v460 = vrot.slane %v443, %v459
    %v465 = vmul.f32 %v440, %v448
    %v466 = vmul.f32 %v439, %v452
    %v467 = vmul.f32 %v438, %v456
    %v468 = vmul.f32 %v441, %v460
    %469 = vst [vmem:[#allocation3 + $0x80] sm:$0xf] %v465
    %470 = vst [vmem:[#allocation3 + $0x88] sm:$0xf] %v466
    %471 = vst [vmem:[#allocation3 + $0x90] sm:$0xf] %v467
    %472 = vst [vmem:[#allocation3 + $0x98] sm:$0xf] %v468
    %v473 = vld [vmem:[#allocation3] sm:$0xff]
    %v474 = vld [vmem:[#allocation3 + $0x8] sm:$0xff]
    %v475 = vld [vmem:[#allocation3 + $0x10] sm:$0xff]
    %v476 = vld [vmem:[#allocation3 + $0x18] sm:$0xff]
    %v477 = vld [vmem:[#allocation3 + $0x20] sm:$0xff]
    %v478 = vld [vmem:[#allocation3 + $0x28] sm:$0xff]
    %v479 = vld [vmem:[#allocation3 + $0x30] sm:$0xff]
    %v480 = vld [vmem:[#allocation3 + $0x38] sm:$0xff]
    %v481 = vld [vmem:[#allocation3 + $0x40] sm:$0xff]
    %v482 = vld [vmem:[#allocation3 + $0x48] sm:$0xff]
    %v483 = vld [vmem:[#allocation3 + $0x50] sm:$0xff]
    %v484 = vld [vmem:[#allocation3 + $0x58] sm:$0xff]
    %v485 = vld [vmem:[#allocation3 + $0x60] sm:$0xff]
    %v486 = vld [vmem:[#allocation3 + $0x68] sm:$0xff]
    %v487 = vld [vmem:[#allocation3 + $0x70] sm:$0xff]
    %v488 = vld [vmem:[#allocation3 + $0x78] sm:$0xff]
    %v489 = vld [vmem:[#allocation3 + $0x80] sm:$0xf]
    %v490 = vld [vmem:[#allocation3 + $0x88] sm:$0xf]
    %v491 = vld [vmem:[#allocation3 + $0x90] sm:$0xf]
    %v492 = vld [vmem:[#allocation3 + $0x98] sm:$0xf]
    %494 = vset.pattern.permute.xlu0 0
    %495 = vperm.xlu0 %494, %v63
    %v496 = vpop.permute.xlu0 %495
    %vm498 = vcmask 293888
    %v500 = vsel %vm498, %v62, 0
    %vm502 = vcmask 1043456
    %v504 = vsel %vm502, %v489, 0
    %v507 = vsel %vm502, %v490, 0
    %v510 = vsel %vm502, %v491, 0
    %v513 = vsel %vm502, %v492, 0
    %515 = vmatprep.subr.mxu0 0.0
    %516 = vmatpush1.msra.mxu0 0.0
    %517 = vmatprep.subr.mxu0 0.0
    %518 = vmatpush1.msra.mxu0 0.0
    %519 = vmatprep.subr.mxu0 0.0
    %520 = vmatpush1.msra.mxu0 0.0
    %521 = vmatprep.subr.mxu0 0.0
    %522 = vmatpush1.msra.mxu0 0.0
    %523 = vmatprep.subr.mxu0 0.0
    %524 = vmatpush1.msra.mxu0 0.0
    %525 = vmatprep.subr.mxu0 0.0
    %526 = vmatpush1.msra.mxu0 0.0
    %527 = vmatprep.subr.mxu0 0.0
    %528 = vmatpush1.msra.mxu0 0.0
    %529 = vmatprep.subr.mxu0 0.0
    %530 = vmatpush1.msra.mxu0 0.0
    %531 = vmatprep.subr.mxu0 0.0
    %532 = vmatpush1.msra.mxu0 0.0
    %533 = vmatprep.subr.mxu0 0.0
    %534 = vmatpush1.msra.mxu0 0.0
    %535 = vmatprep.subr.mxu0 0.0
    %536 = vmatpush1.msra.mxu0 0.0
    %537 = vmatprep.subr.mxu0 %v507
    %538 = vmatpush1.msra.mxu0 %v504
    %539 = vmatprep.subr.mxu0 %v486
    %540 = vmatpush1.msra.mxu0 %v485
    %541 = vmatprep.subr.mxu0 %v482
    %542 = vmatpush1.msra.mxu0 %v481
    %543 = vmatprep.subr.mxu0 %v478
    %544 = vmatpush1.msra.mxu0 %v477
    %545 = vmatprep.subr.mxu0 %v474
    %546 = vmatpush1.msra.mxu0 %v473
    %547 = vmatprep.subr.mxu0 0.0
    %548 = vmatpush2.msra.mxu0 0.0
    %549 = vmatprep.subr.mxu0 0.0
    %550 = vmatpush2.msra.mxu0 0.0
    %551 = vmatprep.subr.mxu0 0.0
    %552 = vmatpush2.msra.mxu0 0.0
    %553 = vmatprep.subr.mxu0 0.0
    %554 = vmatpush2.msra.mxu0 0.0
    %555 = vmatprep.subr.mxu0 0.0
    %556 = vmatpush2.msra.mxu0 0.0
    %557 = vmatprep.subr.mxu0 0.0
    %558 = vmatpush2.msra.mxu0 0.0
    %559 = vmatprep.subr.mxu0 0.0
    %560 = vmatpush2.msra.mxu0 0.0
    %561 = vmatprep.subr.mxu0 0.0
    %562 = vmatpush2.msra.mxu0 0.0
    %563 = vmatprep.subr.mxu0 0.0
    %564 = vmatpush2.msra.mxu0 0.0
    %565 = vmatprep.subr.mxu0 0.0
    %566 = vmatpush2.msra.mxu0 0.0
    %567 = vmatprep.subr.mxu0 0.0
    %568 = vmatpush2.msra.mxu0 0.0
    %569 = vmatprep.subr.mxu0 0.0
    %570 = vmatpush2.msra.mxu0 0.0
    %571 = vmatprep.subr.mxu0 0.0
    %572 = vmatpush2.msra.mxu0 0.0
    %573 = vmatprep.subr.mxu0 0.0
    %574 = vmatpush2.msra.mxu0 0.0
    %575 = vmatprep.subr.mxu0 0.0
    %576 = vmatpush2.msra.mxu0 0.0
    %577 = vmatprep.subr.mxu0 0.0
    %578 = vmatpush2.msra.mxu0 0.0
    %579 = vmatprep.mubr.f32.mxu0 0.0
    %580 = vmatmul.mubr.f32.gmra.mxu0 %v500
    %v581 = vpop.f32.mrf.mxu0
    %v582 = vadd.f32 %v496, %v581
    %v583 = vpop.f32.mrf.mxu0
    %v584 = vadd.f32 %v496, %v583
    %585 = vdwg.mxu0
    %586 = vmatprep.subr.mxu0 0.0
    %587 = vmatpush1.msra.mxu0 0.0
    %588 = vmatprep.subr.mxu0 0.0
    %589 = vmatpush1.msra.mxu0 0.0
    %590 = vmatprep.subr.mxu0 0.0
    %591 = vmatpush1.msra.mxu0 0.0
    %592 = vmatprep.subr.mxu0 0.0
    %593 = vmatpush1.msra.mxu0 0.0
    %594 = vmatprep.subr.mxu0 0.0
    %595 = vmatpush1.msra.mxu0 0.0
    %596 = vmatprep.subr.mxu0 0.0
    %597 = vmatpush1.msra.mxu0 0.0
    %598 = vmatprep.subr.mxu0 0.0
    %599 = vmatpush1.msra.mxu0 0.0
    %600 = vmatprep.subr.mxu0 0.0
    %601 = vmatpush1.msra.mxu0 0.0
    %602 = vmatprep.subr.mxu0 0.0
    %603 = vmatpush1.msra.mxu0 0.0
    %604 = vmatprep.subr.mxu0 0.0
    %605 = vmatpush1.msra.mxu0 0.0
    %606 = vmatprep.subr.mxu0 0.0
    %607 = vmatpush1.msra.mxu0 0.0
    %608 = vmatprep.subr.mxu0 %v513
    %609 = vmatpush1.msra.mxu0 %v510
    %610 = vmatprep.subr.mxu0 %v488
    %611 = vmatpush1.msra.mxu0 %v487
    %612 = vmatprep.subr.mxu0 %v484
    %613 = vmatpush1.msra.mxu0 %v483
    %614 = vmatprep.subr.mxu0 %v480
    %615 = vmatpush1.msra.mxu0 %v479
    %616 = vmatprep.subr.mxu0 %v476
    %617 = vmatpush1.msra.mxu0 %v475
    %618 = vmatprep.subr.mxu0 0.0
    %619 = vmatpush2.msra.mxu0 0.0
    %620 = vmatprep.subr.mxu0 0.0
    %621 = vmatpush2.msra.mxu0 0.0
    %622 = vmatprep.subr.mxu0 0.0
    %623 = vmatpush2.msra.mxu0 0.0
    %624 = vmatprep.subr.mxu0 0.0
    %625 = vmatpush2.msra.mxu0 0.0
    %626 = vmatprep.subr.mxu0 0.0
    %627 = vmatpush2.msra.mxu0 0.0
    %628 = vmatprep.subr.mxu0 0.0
    %629 = vmatpush2.msra.mxu0 0.0
    %630 = vmatprep.subr.mxu0 0.0
    %631 = vmatpush2.msra.mxu0 0.0
    %632 = vmatprep.subr.mxu0 0.0
    %633 = vmatpush2.msra.mxu0 0.0
    %634 = vmatprep.subr.mxu0 0.0
    %635 = vmatpush2.msra.mxu0 0.0
    %636 = vmatprep.subr.mxu0 0.0
    %637 = vmatpush2.msra.mxu0 0.0
    %638 = vmatprep.subr.mxu0 0.0
    %639 = vmatpush2.msra.mxu0 0.0
    %640 = vmatprep.subr.mxu0 0.0
    %641 = vmatpush2.msra.mxu0 0.0
    %642 = vmatprep.subr.mxu0 0.0
    %643 = vmatpush2.msra.mxu0 0.0
    %644 = vmatprep.subr.mxu0 0.0
    %645 = vmatpush2.msra.mxu0 0.0
    %646 = vmatprep.subr.mxu0 0.0
    %647 = vmatpush2.msra.mxu0 0.0
    %648 = vmatprep.subr.mxu0 0.0
    %649 = vmatpush2.msra.mxu0 0.0
    %650 = vmatprep.mubr.f32.mxu0 0.0
    %651 = vmatmul.mubr.f32.gmra.mxu0 %v500
    %v652 = vpop.f32.mrf.mxu0
    %v653 = vadd.f32 %v496, %v652
    %v654 = vpop.f32.mrf.mxu0
    %v655 = vadd.f32 %v496, %v654
    %656 = vdwg.mxu0
    %v657 = vmax.f32 %v582, 0.0
    %v658 = vmax.f32 %v584, 0.0
    %v659 = vmax.f32 %v653, 0.0
    %v660 = vmax.f32 %v655, 0.0
    %v665 = vrot.slane %v657, 4
    %v666 = vrot.slane %v658, 4
    %v667 = vrot.slane %v659, 4
    %v668 = vrot.slane %v660, 4
    %673 = vst [vmem:[#allocation2] sm:$0xf0] %v665
    %674 = vst [vmem:[#allocation2 + $0x8] sm:$0xf0] %v666
    %675 = vst [vmem:[#allocation2 + $0x10] sm:$0xf0] %v667
    %676 = vst [vmem:[#allocation2 + $0x18] sm:$0xf0] %v668
    %v677 = vld [vmem:[%s4] sm:$0xf]
    %v678 = vld [vmem:[%s5] sm:$0xf]
    %v679 = vld [vmem:[#allocation2] sm:$0xff]
    %v680 = vld [vmem:[#allocation2 + $0x8] sm:$0xff]
    %v681 = vld [vmem:[#allocation2 + $0x10] sm:$0xff]
    %v682 = vld [vmem:[#allocation2 + $0x18] sm:$0xff]
    %683 = vrot.lane.b32.xlu0 %v679, 17
    %v684 = vpop.permute.xlu0 %683
    %685 = vrot.lane.b32.xlu0 %v680, 17
    %v686 = vpop.permute.xlu0 %685
    %687 = vrot.lane.b32.xlu0 %v681, 17
    %v688 = vpop.permute.xlu0 %687
    %689 = vrot.lane.b32.xlu0 %v682, 17
    %v690 = vpop.permute.xlu0 %689
    %v691 = vsel %vm78, %v688, %v690
    %v692 = vsel %vm78, %v686, %v688
    %v693 = vsel %vm78, %v684, %v686
    %v694 = vsel %vm78, %v690, %v684
    %v695 = vld [vmem:[#allocation4] ss:$8 sm:$0xf]
    %v697 = vlaneseq
    %v698 = vshrl.u32 %v697, 7
    %v699 = vsub.s32 0, %v698
    %v700 = vrot.slane %v695, %v699
    %v701 = vlaneseq
    %v702 = vshrl.u32 %v701, 7
    %v703 = vsub.s32 1, %v702
    %v704 = vrot.slane %v695, %v703
    %v705 = vlaneseq
    %v706 = vshrl.u32 %v705, 7
    %v707 = vsub.s32 2, %v706
    %v708 = vrot.slane %v695, %v707
    %v709 = vlaneseq
    %v710 = vshrl.u32 %v709, 7
    %v711 = vsub.s32 3, %v710
    %v712 = vrot.slane %v695, %v711
    %v717 = vmul.f32 %v694, %v700
    %v718 = vmul.f32 %v693, %v704
    %v719 = vmul.f32 %v692, %v708
    %v720 = vmul.f32 %v691, %v712
    %721 = vst [vmem:[#allocation3] sm:$0xff] %v717
    %722 = vst [vmem:[#allocation3 + $0x8] sm:$0xff] %v718
    %723 = vst [vmem:[#allocation3 + $0x10] sm:$0xff] %v719
    %724 = vst [vmem:[#allocation3 + $0x18] sm:$0xff] %v720
    %725 = vrot.lane.b32.xlu0 %v679, 16
    %v726 = vpop.permute.xlu0 %725
    %727 = vrot.lane.b32.xlu0 %v680, 16
    %v728 = vpop.permute.xlu0 %727
    %729 = vrot.lane.b32.xlu0 %v681, 16
    %v730 = vpop.permute.xlu0 %729
    %731 = vrot.lane.b32.xlu0 %v682, 16
    %v732 = vpop.permute.xlu0 %731
    %v733 = vsel %vm121, %v730, %v732
    %v734 = vsel %vm121, %v728, %v730
    %v735 = vsel %vm121, %v726, %v728
    %v736 = vsel %vm121, %v732, %v726
    %v737 = vld [vmem:[%s126] ss:$8 sm:$0xf]
    %v739 = vlaneseq
    %v740 = vshrl.u32 %v739, 7
    %v741 = vsub.s32 0, %v740
    %v742 = vrot.slane %v737, %v741
    %v743 = vlaneseq
    %v744 = vshrl.u32 %v743, 7
    %v745 = vsub.s32 1, %v744
    %v746 = vrot.slane %v737, %v745
    %v747 = vlaneseq
    %v748 = vshrl.u32 %v747, 7
    %v749 = vsub.s32 2, %v748
    %v750 = vrot.slane %v737, %v749
    %v751 = vlaneseq
    %v752 = vshrl.u32 %v751, 7
    %v753 = vsub.s32 3, %v752
    %v754 = vrot.slane %v737, %v753
    %v759 = vmul.f32 %v736, %v742
    %v760 = vmul.f32 %v735, %v746
    %v761 = vmul.f32 %v734, %v750
    %v762 = vmul.f32 %v733, %v754
    %763 = vst [vmem:[#allocation3 + $0x20] sm:$0xff] %v759
    %764 = vst [vmem:[#allocation3 + $0x28] sm:$0xff] %v760
    %765 = vst [vmem:[#allocation3 + $0x30] sm:$0xff] %v761
    %766 = vst [vmem:[#allocation3 + $0x38] sm:$0xff] %v762
    %767 = vrot.lane.b32.xlu0 %v679, 15
    %v768 = vpop.permute.xlu0 %767
    %769 = vrot.lane.b32.xlu0 %v680, 15
    %v770 = vpop.permute.xlu0 %769
    %771 = vrot.lane.b32.xlu0 %v681, 15
    %v772 = vpop.permute.xlu0 %771
    %773 = vrot.lane.b32.xlu0 %v682, 15
    %v774 = vpop.permute.xlu0 %773
    %v775 = vsel %vm177, %v772, %v774
    %v776 = vsel %vm177, %v770, %v772
    %v777 = vsel %vm177, %v768, %v770
    %v778 = vsel %vm177, %v774, %v768
    %v779 = vld [vmem:[%s182] ss:$8 sm:$0xf]
    %v781 = vlaneseq
    %v782 = vshrl.u32 %v781, 7
    %v783 = vsub.s32 0, %v782
    %v784 = vrot.slane %v779, %v783
    %v785 = vlaneseq
    %v786 = vshrl.u32 %v785, 7
    %v787 = vsub.s32 1, %v786
    %v788 = vrot.slane %v779, %v787
    %v789 = vlaneseq
    %v790 = vshrl.u32 %v789, 7
    %v791 = vsub.s32 2, %v790
    %v792 = vrot.slane %v779, %v791
    %v793 = vlaneseq
    %v794 = vshrl.u32 %v793, 7
    %v795 = vsub.s32 3, %v794
    %v796 = vrot.slane %v779, %v795
    %v801 = vmul.f32 %v778, %v784
    %v802 = vmul.f32 %v777, %v788
    %v803 = vmul.f32 %v776, %v792
    %v804 = vmul.f32 %v775, %v796
    %805 = vst [vmem:[#allocation3 + $0x40] sm:$0xff] %v801
    %806 = vst [vmem:[#allocation3 + $0x48] sm:$0xff] %v802
    %807 = vst [vmem:[#allocation3 + $0x50] sm:$0xff] %v803
    %808 = vst [vmem:[#allocation3 + $0x58] sm:$0xff] %v804
    %809 = vrot.lane.b32.xlu0 %v679, 1
    %v810 = vpop.permute.xlu0 %809
    %811 = vrot.lane.b32.xlu0 %v680, 1
    %v812 = vpop.permute.xlu0 %811
    %813 = vrot.lane.b32.xlu0 %v681, 1
    %v814 = vpop.permute.xlu0 %813
    %815 = vrot.lane.b32.xlu0 %v682, 1
    %v816 = vpop.permute.xlu0 %815
    %v817 = vsel %vm221, %v814, %v816
    %v818 = vsel %vm221, %v812, %v814
    %v819 = vsel %vm221, %v810, %v812
    %v820 = vsel %vm221, %v816, %v810
    %v821 = vld [vmem:[%s226] ss:$8 sm:$0xf]
    %v823 = vlaneseq
    %v824 = vshrl.u32 %v823, 7
    %v825 = vsub.s32 0, %v824
    %v826 = vrot.slane %v821, %v825
    %v827 = vlaneseq
    %v828 = vshrl.u32 %v827, 7
    %v829 = vsub.s32 1, %v828
    %v830 = vrot.slane %v821, %v829
    %v831 = vlaneseq
    %v832 = vshrl.u32 %v831, 7
    %v833 = vsub.s32 2, %v832
    %v834 = vrot.slane %v821, %v833
    %v835 = vlaneseq
    %v836 = vshrl.u32 %v835, 7
    %v837 = vsub.s32 3, %v836
    %v838 = vrot.slane %v821, %v837
    %v843 = vmul.f32 %v820, %v826
    %v844 = vmul.f32 %v819, %v830
    %v845 = vmul.f32 %v818, %v834
    %v846 = vmul.f32 %v817, %v838
    %847 = vst [vmem:[#allocation3 + $0x60] sm:$0xff] %v843
    %848 = vst [vmem:[#allocation3 + $0x68] sm:$0xff] %v844
    %849 = vst [vmem:[#allocation3 + $0x70] sm:$0xff] %v845
    %850 = vst [vmem:[#allocation3 + $0x78] sm:$0xff] %v846
    %851 = vst [vmem:[#allocation3 + $0x80] sm:$0xff] %v679
    %852 = vst [vmem:[#allocation3 + $0x88] sm:$0xff] %v680
    %853 = vst [vmem:[#allocation3 + $0x90] sm:$0xff] %v681
    %854 = vst [vmem:[#allocation3 + $0x98] sm:$0xff] %v682
    %855 = vrot.lane.b32.xlu0 %v679, 127
    %v856 = vpop.permute.xlu0 %855
    %857 = vrot.lane.b32.xlu0 %v680, 127
    %v858 = vpop.permute.xlu0 %857
    %859 = vrot.lane.b32.xlu0 %v681, 127
    %v860 = vpop.permute.xlu0 %859
    %861 = vrot.lane.b32.xlu0 %v682, 127
    %v862 = vpop.permute.xlu0 %861
    %v863 = vsel %vm281, %v860, %v862
    %v864 = vsel %vm281, %v858, %v860
    %v865 = vsel %vm281, %v856, %v858
    %v866 = vsel %vm281, %v862, %v856
    %v867 = vld [vmem:[%s286] ss:$8 sm:$0xf]
    %v869 = vlaneseq
    %v870 = vshrl.u32 %v869, 7
    %v871 = vsub.s32 0, %v870
    %v872 = vrot.slane %v867, %v871
    %v873 = vlaneseq
    %v874 = vshrl.u32 %v873, 7
    %v875 = vsub.s32 1, %v874
    %v876 = vrot.slane %v867, %v875
    %v877 = vlaneseq
    %v878 = vshrl.u32 %v877, 7
    %v879 = vsub.s32 2, %v878
    %v880 = vrot.slane %v867, %v879
    %v881 = vlaneseq
    %v882 = vshrl.u32 %v881, 7
    %v883 = vsub.s32 3, %v882
    %v884 = vrot.slane %v867, %v883
    %v889 = vmul.f32 %v865, %v872
    %v890 = vmul.f32 %v864, %v876
    %v891 = vmul.f32 %v863, %v880
    %v892 = vmul.f32 %v866, %v884
    %893 = vst [vmem:[#allocation3 + $0xa0] sm:$0xff] %v889
    %894 = vst [vmem:[#allocation3 + $0xa8] sm:$0xff] %v890
    %895 = vst [vmem:[#allocation3 + $0xb0] sm:$0xff] %v891
    %896 = vst [vmem:[#allocation3 + $0xb8] sm:$0xff] %v892
    %897 = vrot.lane.b32.xlu0 %v679, 113
    %v898 = vpop.permute.xlu0 %897
    %899 = vrot.lane.b32.xlu0 %v680, 113
    %v900 = vpop.permute.xlu0 %899
    %901 = vrot.lane.b32.xlu0 %v681, 113
    %v902 = vpop.permute.xlu0 %901
    %903 = vrot.lane.b32.xlu0 %v682, 113
    %v904 = vpop.permute.xlu0 %903
    %v905 = vsel %vm337, %v902, %v904
    %v906 = vsel %vm337, %v900, %v902
    %v907 = vsel %vm337, %v898, %v900
    %v908 = vsel %vm337, %v904, %v898
    %v909 = vld [vmem:[%s342] ss:$8 sm:$0xf]
    %v911 = vlaneseq
    %v912 = vshrl.u32 %v911, 7
    %v913 = vsub.s32 0, %v912
    %v914 = vrot.slane %v909, %v913
    %v915 = vlaneseq
    %v916 = vshrl.u32 %v915, 7
    %v917 = vsub.s32 1, %v916
    %v918 = vrot.slane %v909, %v917
    %v919 = vlaneseq
    %v920 = vshrl.u32 %v919, 7
    %v921 = vsub.s32 2, %v920
    %v922 = vrot.slane %v909, %v921
    %v923 = vlaneseq
    %v924 = vshrl.u32 %v923, 7
    %v925 = vsub.s32 3, %v924
    %v926 = vrot.slane %v909, %v925
    %v931 = vmul.f32 %v907, %v914
    %v932 = vmul.f32 %v906, %v918
    %v933 = vmul.f32 %v905, %v922
    %v934 = vmul.f32 %v908, %v926
    %935 = vst [vmem:[#allocation3 + $0xc0] sm:$0xff] %v931
    %936 = vst [vmem:[#allocation3 + $0xc8] sm:$0xff] %v932
    %937 = vst [vmem:[#allocation3 + $0xd0] sm:$0xff] %v933
    %938 = vst [vmem:[#allocation3 + $0xd8] sm:$0xff] %v934
    %939 = vrot.lane.b32.xlu0 %v679, 112
    %v940 = vpop.permute.xlu0 %939
    %941 = vrot.lane.b32.xlu0 %v680, 112
    %v942 = vpop.permute.xlu0 %941
    %943 = vrot.lane.b32.xlu0 %v681, 112
    %v944 = vpop.permute.xlu0 %943
    %945 = vrot.lane.b32.xlu0 %v682, 112
    %v946 = vpop.permute.xlu0 %945
    %v947 = vsel %vm381, %v944, %v946
    %v948 = vsel %vm381, %v942, %v944
    %v949 = vsel %vm381, %v940, %v942
    %v950 = vsel %vm381, %v946, %v940
    %v951 = vld [vmem:[%s386] ss:$8 sm:$0xf]
    %v953 = vlaneseq
    %v954 = vshrl.u32 %v953, 7
    %v955 = vsub.s32 0, %v954
    %v956 = vrot.slane %v951, %v955
    %v957 = vlaneseq
    %v958 = vshrl.u32 %v957, 7
    %v959 = vsub.s32 1, %v958
    %v960 = vrot.slane %v951, %v959
    %v961 = vlaneseq
    %v962 = vshrl.u32 %v961, 7
    %v963 = vsub.s32 2, %v962
    %v964 = vrot.slane %v951, %v963
    %v965 = vlaneseq
    %v966 = vshrl.u32 %v965, 7
    %v967 = vsub.s32 3, %v966
    %v968 = vrot.slane %v951, %v967
    %v973 = vmul.f32 %v949, %v956
    %v974 = vmul.f32 %v948, %v960
    %v975 = vmul.f32 %v947, %v964
    %v976 = vmul.f32 %v950, %v968
    %977 = vst [vmem:[#allocation3 + $0xe0] sm:$0xff] %v973
    %978 = vst [vmem:[#allocation3 + $0xe8] sm:$0xff] %v974
    %979 = vst [vmem:[#allocation3 + $0xf0] sm:$0xff] %v975
    %980 = vst [vmem:[#allocation3 + $0xf8] sm:$0xff] %v976
    %981 = vrot.lane.b32.xlu0 %v679, 111
    %v982 = vpop.permute.xlu0 %981
    %983 = vrot.lane.b32.xlu0 %v680, 111
    %v984 = vpop.permute.xlu0 %983
    %985 = vrot.lane.b32.xlu0 %v681, 111
    %v986 = vpop.permute.xlu0 %985
    %987 = vrot.lane.b32.xlu0 %v682, 111
    %v988 = vpop.permute.xlu0 %987
    %v989 = vsel %vm437, %v986, %v988
    %v990 = vsel %vm437, %v984, %v986
    %v991 = vsel %vm437, %v982, %v984
    %v992 = vsel %vm437, %v988, %v982
    %v993 = vld [vmem:[%s442] ss:$8 sm:$0xf]
    %v995 = vlaneseq
    %v996 = vshrl.u32 %v995, 7
    %v997 = vsub.s32 0, %v996
    %v998 = vrot.slane %v993, %v997
    %v999 = vlaneseq
    %v1000 = vshrl.u32 %v999, 7
    %v1001 = vsub.s32 1, %v1000
    %v1002 = vrot.slane %v993, %v1001
    %v1003 = vlaneseq
    %v1004 = vshrl.u32 %v1003, 7
    %v1005 = vsub.s32 2, %v1004
    %v1006 = vrot.slane %v993, %v1005
    %v1007 = vlaneseq
    %v1008 = vshrl.u32 %v1007, 7
    %v1009 = vsub.s32 3, %v1008
    %v1010 = vrot.slane %v993, %v1009
    %v1015 = vmul.f32 %v991, %v998
    %v1016 = vmul.f32 %v990, %v1002
    %v1017 = vmul.f32 %v989, %v1006
    %v1018 = vmul.f32 %v992, %v1010
    %1019 = vst [vmem:[#allocation3 + $0x100] sm:$0xff] %v1015
    %1020 = vst [vmem:[#allocation3 + $0x108] sm:$0xff] %v1016
    %1021 = vst [vmem:[#allocation3 + $0x110] sm:$0xff] %v1017
    %1022 = vst [vmem:[#allocation3 + $0x118] sm:$0xff] %v1018
    %v1023 = vld [vmem:[#allocation3] sm:$0xff]
    %v1024 = vld [vmem:[#allocation3 + $0x8] sm:$0xff]
    %v1025 = vld [vmem:[#allocation3 + $0x10] sm:$0xff]
    %v1026 = vld [vmem:[#allocation3 + $0x18] sm:$0xff]
    %v1027 = vld [vmem:[#allocation3 + $0x20] sm:$0xff]
    %v1028 = vld [vmem:[#allocation3 + $0x28] sm:$0xff]
    %v1029 = vld [vmem:[#allocation3 + $0x30] sm:$0xff]
    %v1030 = vld [vmem:[#allocation3 + $0x38] sm:$0xff]
    %v1031 = vld [vmem:[#allocation3 + $0x40] sm:$0xff]
    %v1032 = vld [vmem:[#allocation3 + $0x48] sm:$0xff]
    %v1033 = vld [vmem:[#allocation3 + $0x50] sm:$0xff]
    %v1034 = vld [vmem:[#allocation3 + $0x58] sm:$0xff]
    %v1035 = vld [vmem:[#allocation3 + $0x60] sm:$0xff]
    %v1036 = vld [vmem:[#allocation3 + $0x68] sm:$0xff]
    %v1037 = vld [vmem:[#allocation3 + $0x70] sm:$0xff]
    %v1038 = vld [vmem:[#allocation3 + $0x78] sm:$0xff]
    %v1039 = vld [vmem:[#allocation3 + $0x80] sm:$0xff]
    %v1040 = vld [vmem:[#allocation3 + $0x88] sm:$0xff]
    %v1041 = vld [vmem:[#allocation3 + $0x90] sm:$0xff]
    %v1042 = vld [vmem:[#allocation3 + $0x98] sm:$0xff]
    %v1043 = vld [vmem:[#allocation3 + $0xa0] sm:$0xff]
    %v1044 = vld [vmem:[#allocation3 + $0xa8] sm:$0xff]
    %v1045 = vld [vmem:[#allocation3 + $0xb0] sm:$0xff]
    %v1046 = vld [vmem:[#allocation3 + $0xb8] sm:$0xff]
    %v1047 = vld [vmem:[#allocation3 + $0xc0] sm:$0xff]
    %v1048 = vld [vmem:[#allocation3 + $0xc8] sm:$0xff]
    %v1049 = vld [vmem:[#allocation3 + $0xd0] sm:$0xff]
    %v1050 = vld [vmem:[#allocation3 + $0xd8] sm:$0xff]
    %v1051 = vld [vmem:[#allocation3 + $0xe0] sm:$0xff]
    %v1052 = vld [vmem:[#allocation3 + $0xe8] sm:$0xff]
    %v1053 = vld [vmem:[#allocation3 + $0xf0] sm:$0xff]
    %v1054 = vld [vmem:[#allocation3 + $0xf8] sm:$0xff]
    %v1055 = vld [vmem:[#allocation3 + $0x100] sm:$0xff]
    %v1056 = vld [vmem:[#allocation3 + $0x108] sm:$0xff]
    %v1057 = vld [vmem:[#allocation3 + $0x110] sm:$0xff]
    %v1058 = vld [vmem:[#allocation3 + $0x118] sm:$0xff]
    %1060 = vset.pattern.permute.xlu0 0
    %1061 = vperm.xlu0 %1060, %v678
    %v1062 = vpop.permute.xlu0 %1061
    %vm1064 = vcmask 588800
    %v1066 = vsel %vm1064, %v677, 0
    %1068 = vmatprep.subr.mxu0 0.0
    %1069 = vmatpush1.msra.mxu0 0.0
    %1070 = vmatprep.subr.mxu0 0.0
    %1071 = vmatpush1.msra.mxu0 0.0
    %1072 = vmatprep.subr.mxu0 0.0
    %1073 = vmatpush1.msra.mxu0 0.0
    %1074 = vmatprep.subr.mxu0 0.0
    %1075 = vmatpush1.msra.mxu0 0.0
    %1076 = vmatprep.subr.mxu0 0.0
    %1077 = vmatpush1.msra.mxu0 0.0
    %1078 = vmatprep.subr.mxu0 0.0
    %1079 = vmatpush1.msra.mxu0 0.0
    %1080 = vmatprep.subr.mxu0 0.0
    %1081 = vmatpush1.msra.mxu0 0.0
    %1082 = vmatprep.subr.mxu0 %v1056
    %1083 = vmatpush1.msra.mxu0 %v1055
    %1084 = vmatprep.subr.mxu0 %v1052
    %1085 = vmatpush1.msra.mxu0 %v1051
    %1086 = vmatprep.subr.mxu0 %v1048
    %1087 = vmatpush1.msra.mxu0 %v1047
    %1088 = vmatprep.subr.mxu0 %v1044
    %1089 = vmatpush1.msra.mxu0 %v1043
    %1090 = vmatprep.subr.mxu0 %v1040
    %1091 = vmatpush1.msra.mxu0 %v1039
    %1092 = vmatprep.subr.mxu0 %v1036
    %1093 = vmatpush1.msra.mxu0 %v1035
    %1094 = vmatprep.subr.mxu0 %v1032
    %1095 = vmatpush1.msra.mxu0 %v1031
    %1096 = vmatprep.subr.mxu0 %v1028
    %1097 = vmatpush1.msra.mxu0 %v1027
    %1098 = vmatprep.subr.mxu0 %v1024
    %1099 = vmatpush1.msra.mxu0 %v1023
    %1100 = vmatprep.subr.mxu0 0.0
    %1101 = vmatpush2.msra.mxu0 0.0
    %1102 = vmatprep.subr.mxu0 0.0
    %1103 = vmatpush2.msra.mxu0 0.0
    %1104 = vmatprep.subr.mxu0 0.0
    %1105 = vmatpush2.msra.mxu0 0.0
    %1106 = vmatprep.subr.mxu0 0.0
    %1107 = vmatpush2.msra.mxu0 0.0
    %1108 = vmatprep.subr.mxu0 0.0
    %1109 = vmatpush2.msra.mxu0 0.0
    %1110 = vmatprep.subr.mxu0 0.0
    %1111 = vmatpush2.msra.mxu0 0.0
    %1112 = vmatprep.subr.mxu0 0.0
    %1113 = vmatpush2.msra.mxu0 0.0
    %1114 = vmatprep.subr.mxu0 0.0
    %1115 = vmatpush2.msra.mxu0 0.0
    %1116 = vmatprep.subr.mxu0 0.0
    %1117 = vmatpush2.msra.mxu0 0.0
    %1118 = vmatprep.subr.mxu0 0.0
    %1119 = vmatpush2.msra.mxu0 0.0
    %1120 = vmatprep.subr.mxu0 0.0
    %1121 = vmatpush2.msra.mxu0 0.0
    %1122 = vmatprep.subr.mxu0 0.0
    %1123 = vmatpush2.msra.mxu0 0.0
    %1124 = vmatprep.subr.mxu0 0.0
    %1125 = vmatpush2.msra.mxu0 0.0
    %1126 = vmatprep.subr.mxu0 0.0
    %1127 = vmatpush2.msra.mxu0 0.0
    %1128 = vmatprep.subr.mxu0 0.0
    %1129 = vmatpush2.msra.mxu0 0.0
    %1130 = vmatprep.subr.mxu0 0.0
    %1131 = vmatpush2.msra.mxu0 0.0
    %1132 = vmatprep.mubr.f32.mxu0 0.0
    %1133 = vmatmul.mubr.f32.gmra.mxu0 %v1066
    %v1134 = vpop.f32.mrf.mxu0
    %v1135 = vadd.f32 %v1062, %v1134
    %v1136 = vpop.f32.mrf.mxu0
    %v1137 = vadd.f32 %v1062, %v1136
    %1138 = vdwg.mxu0
    %1139 = vmatprep.subr.mxu0 0.0
    %1140 = vmatpush1.msra.mxu0 0.0
    %1141 = vmatprep.subr.mxu0 0.0
    %1142 = vmatpush1.msra.mxu0 0.0
    %1143 = vmatprep.subr.mxu0 0.0
    %1144 = vmatpush1.msra.mxu0 0.0
    %1145 = vmatprep.subr.mxu0 0.0
    %1146 = vmatpush1.msra.mxu0 0.0
    %1147 = vmatprep.subr.mxu0 0.0
    %1148 = vmatpush1.msra.mxu0 0.0
    %1149 = vmatprep.subr.mxu0 0.0
    %1150 = vmatpush1.msra.mxu0 0.0
    %1151 = vmatprep.subr.mxu0 0.0
    %1152 = vmatpush1.msra.mxu0 0.0
    %1153 = vmatprep.subr.mxu0 %v1058
    %1154 = vmatpush1.msra.mxu0 %v1057
    %1155 = vmatprep.subr.mxu0 %v1054
    %1156 = vmatpush1.msra.mxu0 %v1053
    %1157 = vmatprep.subr.mxu0 %v1050
    %1158 = vmatpush1.msra.mxu0 %v1049
    %1159 = vmatprep.subr.mxu0 %v1046
    %1160 = vmatpush1.msra.mxu0 %v1045
    %1161 = vmatprep.subr.mxu0 %v1042
    %1162 = vmatpush1.msra.mxu0 %v1041
    %1163 = vmatprep.subr.mxu0 %v1038
    %1164 = vmatpush1.msra.mxu0 %v1037
    %1165 = vmatprep.subr.mxu0 %v1034
    %1166 = vmatpush1.msra.mxu0 %v1033
    %1167 = vmatprep.subr.mxu0 %v1030
    %1168 = vmatpush1.msra.mxu0 %v1029
    %1169 = vmatprep.subr.mxu0 %v1026
    %1170 = vmatpush1.msra.mxu0 %v1025
    %1171 = vmatprep.subr.mxu0 0.0
    %1172 = vmatpush2.msra.mxu0 0.0
    %1173 = vmatprep.subr.mxu0 0.0
    %1174 = vmatpush2.msra.mxu0 0.0
    %1175 = vmatprep.subr.mxu0 0.0
    %1176 = vmatpush2.msra.mxu0 0.0
    %1177 = vmatprep.subr.mxu0 0.0
    %1178 = vmatpush2.msra.mxu0 0.0
    %1179 = vmatprep.subr.mxu0 0.0
    %1180 = vmatpush2.msra.mxu0 0.0
    %1181 = vmatprep.subr.mxu0 0.0
    %1182 = vmatpush2.msra.mxu0 0.0
    %1183 = vmatprep.subr.mxu0 0.0
    %1184 = vmatpush2.msra.mxu0 0.0
    %1185 = vmatprep.subr.mxu0 0.0
    %1186 = vmatpush2.msra.mxu0 0.0
    %1187 = vmatprep.subr.mxu0 0.0
    %1188 = vmatpush2.msra.mxu0 0.0
    %1189 = vmatprep.subr.mxu0 0.0
    %1190 = vmatpush2.msra.mxu0 0.0
    %1191 = vmatprep.subr.mxu0 0.0
    %1192 = vmatpush2.msra.mxu0 0.0
    %1193 = vmatprep.subr.mxu0 0.0
    %1194 = vmatpush2.msra.mxu0 0.0
    %1195 = vmatprep.subr.mxu0 0.0
    %1196 = vmatpush2.msra.mxu0 0.0
    %1197 = vmatprep.subr.mxu0 0.0
    %1198 = vmatpush2.msra.mxu0 0.0
    %1199 = vmatprep.subr.mxu0 0.0
    %1200 = vmatpush2.msra.mxu0 0.0
    %1201 = vmatprep.subr.mxu0 0.0
    %1202 = vmatpush2.msra.mxu0 0.0
    %1203 = vmatprep.mubr.f32.mxu0 0.0
    %1204 = vmatmul.mubr.f32.gmra.mxu0 %v1066
    %v1205 = vpop.f32.mrf.mxu0
    %v1206 = vadd.f32 %v1062, %v1205
    %v1207 = vpop.f32.mrf.mxu0
    %v1208 = vadd.f32 %v1062, %v1207
    %1209 = vdwg.mxu0
    %v1210 = vmax.f32 %v1135, 0.0
    %v1211 = vmax.f32 %v1137, 0.0
    %v1212 = vmax.f32 %v1206, 0.0
    %v1213 = vmax.f32 %v1208, 0.0
    %1214 = vst [vmem:[#allocation2 + $0x20] sm:$0xf] %v1210
    %1215 = vst [vmem:[#allocation2 + $0x28] sm:$0xf] %v1211
    %1216 = vst [vmem:[#allocation2 + $0x30] sm:$0xf] %v1212
    %1217 = vst [vmem:[#allocation2 + $0x38] sm:$0xf] %v1213
    %v1218 = vld [vmem:[%s6] sm:$0xf]
    %v1219 = vld [vmem:[%s7] sm:$0xf]
    %v1220 = vld [vmem:[#allocation2] sm:$0xff]
    %v1221 = vld [vmem:[#allocation2 + $0x8] sm:$0xff]
    %v1222 = vld [vmem:[#allocation2 + $0x10] sm:$0xff]
    %v1223 = vld [vmem:[#allocation2 + $0x18] sm:$0xff]
    %v1224 = vld [vmem:[#allocation2 + $0x20] sm:$0xf]
    %v1225 = vld [vmem:[#allocation2 + $0x28] sm:$0xf]
    %v1226 = vld [vmem:[#allocation2 + $0x30] sm:$0xf]
    %v1227 = vld [vmem:[#allocation2 + $0x38] sm:$0xf]
    %1228 = vrot.lane.b32.xlu0 %v1220, 17
    %v1229 = vpop.permute.xlu0 %1228
    %1230 = vrot.lane.b32.xlu0 %v1224, 17
    %v1231 = vpop.permute.xlu0 %1230
    %1232 = vrot.lane.b32.xlu0 %v1221, 17
    %v1233 = vpop.permute.xlu0 %1232
    %1234 = vrot.lane.b32.xlu0 %v1225, 17
    %v1235 = vpop.permute.xlu0 %1234
    %1236 = vrot.lane.b32.xlu0 %v1222, 17
    %v1237 = vpop.permute.xlu0 %1236
    %1238 = vrot.lane.b32.xlu0 %v1226, 17
    %v1239 = vpop.permute.xlu0 %1238
    %1240 = vrot.lane.b32.xlu0 %v1223, 17
    %v1241 = vpop.permute.xlu0 %1240
    %1242 = vrot.lane.b32.xlu0 %v1227, 17
    %v1243 = vpop.permute.xlu0 %1242
    %v1244 = vsel %vm78, %v1237, %v1241
    %v1245 = vsel %vm78, %v1239, %v1243
    %v1246 = vsel %vm78, %v1233, %v1237
    %v1247 = vsel %vm78, %v1235, %v1239
    %v1248 = vsel %vm78, %v1229, %v1233
    %v1249 = vsel %vm78, %v1231, %v1235
    %v1250 = vsel %vm78, %v1241, %v1229
    %v1251 = vsel %vm78, %v1243, %v1231
    %v1252 = vld [vmem:[#allocation4] ss:$8 sm:$0xf]
    %v1254 = vlaneseq
    %v1255 = vshrl.u32 %v1254, 7
    %v1256 = vsub.s32 0, %v1255
    %v1257 = vrot.slane %v1252, %v1256
    %v1258 = vlaneseq
    %v1259 = vshrl.u32 %v1258, 7
    %v1260 = vsub.s32 1, %v1259
    %v1261 = vrot.slane %v1252, %v1260
    %v1262 = vlaneseq
    %v1263 = vshrl.u32 %v1262, 7
    %v1264 = vsub.s32 2, %v1263
    %v1265 = vrot.slane %v1252, %v1264
    %v1266 = vlaneseq
    %v1267 = vshrl.u32 %v1266, 7
    %v1268 = vsub.s32 3, %v1267
    %v1269 = vrot.slane %v1252, %v1268
    %v1274 = vmul.f32 %v1250, %v1257
    %v1275 = vmul.f32 %v1248, %v1261
    %v1276 = vmul.f32 %v1246, %v1265
    %v1277 = vmul.f32 %v1244, %v1269
    %v1278 = vmul.f32 %v1251, %v1257
    %v1279 = vmul.f32 %v1249, %v1261
    %v1280 = vmul.f32 %v1247, %v1265
    %v1281 = vmul.f32 %v1245, %v1269
    %1282 = vst [vmem:[#allocation3] sm:$0xff] %v1274
    %1283 = vst [vmem:[#allocation3 + $0x8] sm:$0xff] %v1275
    %1284 = vst [vmem:[#allocation3 + $0x10] sm:$0xff] %v1276
    %1285 = vst [vmem:[#allocation3 + $0x18] sm:$0xff] %v1277
    %1286 = vst [vmem:[#allocation3 + $0x20] sm:$0xf] %v1278
    %1287 = vst [vmem:[#allocation3 + $0x28] sm:$0xf] %v1279
    %1288 = vst [vmem:[#allocation3 + $0x30] sm:$0xf] %v1280
    %1289 = vst [vmem:[#allocation3 + $0x38] sm:$0xf] %v1281
    %1290 = vrot.lane.b32.xlu0 %v1220, 16
    %v1291 = vpop.permute.xlu0 %1290
    %1292 = vrot.lane.b32.xlu0 %v1224, 16
    %v1293 = vpop.permute.xlu0 %1292
    %1294 = vrot.lane.b32.xlu0 %v1221, 16
    %v1295 = vpop.permute.xlu0 %1294
    %1296 = vrot.lane.b32.xlu0 %v1225, 16
    %v1297 = vpop.permute.xlu0 %1296
    %1298 = vrot.lane.b32.xlu0 %v1222, 16
    %v1299 = vpop.permute.xlu0 %1298
    %1300 = vrot.lane.b32.xlu0 %v1226, 16
    %v1301 = vpop.permute.xlu0 %1300
    %1302 = vrot.lane.b32.xlu0 %v1223, 16
    %v1303 = vpop.permute.xlu0 %1302
    %1304 = vrot.lane.b32.xlu0 %v1227, 16
    %v1305 = vpop.permute.xlu0 %1304
    %v1306 = vsel %vm121, %v1299, %v1303
    %v1307 = vsel %vm121, %v1301, %v1305
    %v1308 = vsel %vm121, %v1295, %v1299
    %v1309 = vsel %vm121, %v1297, %v1301
    %v1310 = vsel %vm121, %v1291, %v1295
    %v1311 = vsel %vm121, %v1293, %v1297
    %v1312 = vsel %vm121, %v1303, %v1291
    %v1313 = vsel %vm121, %v1305, %v1293
    %v1314 = vld [vmem:[%s126] ss:$8 sm:$0xf]
    %v1316 = vlaneseq
    %v1317 = vshrl.u32 %v1316, 7
    %v1318 = vsub.s32 0, %v1317
    %v1319 = vrot.slane %v1314, %v1318
    %v1320 = vlaneseq
    %v1321 = vshrl.u32 %v1320, 7
    %v1322 = vsub.s32 1, %v1321
    %v1323 = vrot.slane %v1314, %v1322
    %v1324 = vlaneseq
    %v1325 = vshrl.u32 %v1324, 7
    %v1326 = vsub.s32 2, %v1325
    %v1327 = vrot.slane %v1314, %v1326
    %v1328 = vlaneseq
    %v1329 = vshrl.u32 %v1328, 7
    %v1330 = vsub.s32 3, %v1329
    %v1331 = vrot.slane %v1314, %v1330
    %v1336 = vmul.f32 %v1312, %v1319
    %v1337 = vmul.f32 %v1310, %v1323
    %v1338 = vmul.f32 %v1308, %v1327
    %v1339 = vmul.f32 %v1306, %v1331
    %v1340 = vmul.f32 %v1313, %v1319
    %v1341 = vmul.f32 %v1311, %v1323
    %v1342 = vmul.f32 %v1309, %v1327
    %v1343 = vmul.f32 %v1307, %v1331
    %v1352 = vrot.slane %v1336, 4
    %v1353 = vrot.slane %v1337, 4
    %v1354 = vrot.slane %v1338, 4
    %v1355 = vrot.slane %v1339, 4
    %v1356 = vrot.slane %v1340, 4
    %v1357 = vsel %vm502, %v1352, %v1356
    %v1358 = vrot.slane %v1341, 4
    %v1359 = vsel %vm502, %v1353, %v1358
    %v1360 = vrot.slane %v1342, 4
    %v1361 = vsel %vm502, %v1354, %v1360
    %v1362 = vrot.slane %v1343, 4
    %v1363 = vsel %vm502, %v1355, %v1362
    %1372 = vst [vmem:[#allocation3 + $0x20] sm:$0xf0] %v1352
    %1373 = vst [vmem:[#allocation3 + $0x28] sm:$0xf0] %v1353
    %1374 = vst [vmem:[#allocation3 + $0x30] sm:$0xf0] %v1354
    %1375 = vst [vmem:[#allocation3 + $0x38] sm:$0xf0] %v1355
    %1376 = vst [vmem:[#allocation3 + $0x40] sm:$0xff] %v1357
    %1377 = vst [vmem:[#allocation3 + $0x48] sm:$0xff] %v1359
    %1378 = vst [vmem:[#allocation3 + $0x50] sm:$0xff] %v1361
    %1379 = vst [vmem:[#allocation3 + $0x58] sm:$0xff] %v1363
    %1380 = vrot.lane.b32.xlu0 %v1220, 15
    %v1381 = vpop.permute.xlu0 %1380
    %1382 = vrot.lane.b32.xlu0 %v1224, 15
    %v1383 = vpop.permute.xlu0 %1382
    %1384 = vrot.lane.b32.xlu0 %v1221, 15
    %v1385 = vpop.permute.xlu0 %1384
    %1386 = vrot.lane.b32.xlu0 %v1225, 15
    %v1387 = vpop.permute.xlu0 %1386
    %1388 = vrot.lane.b32.xlu0 %v1222, 15
    %v1389 = vpop.permute.xlu0 %1388
    %1390 = vrot.lane.b32.xlu0 %v1226, 15
    %v1391 = vpop.permute.xlu0 %1390
    %1392 = vrot.lane.b32.xlu0 %v1223, 15
    %v1393 = vpop.permute.xlu0 %1392
    %1394 = vrot.lane.b32.xlu0 %v1227, 15
    %v1395 = vpop.permute.xlu0 %1394
    %v1396 = vsel %vm177, %v1389, %v1393
    %v1397 = vsel %vm177, %v1391, %v1395
    %v1398 = vsel %vm177, %v1385, %v1389
    %v1399 = vsel %vm177, %v1387, %v1391
    %v1400 = vsel %vm177, %v1381, %v1385
    %v1401 = vsel %vm177, %v1383, %v1387
    %v1402 = vsel %vm177, %v1393, %v1381
    %v1403 = vsel %vm177, %v1395, %v1383
    %v1404 = vld [vmem:[%s182] ss:$8 sm:$0xf]
    %v1406 = vlaneseq
    %v1407 = vshrl.u32 %v1406, 7
    %v1408 = vsub.s32 0, %v1407
    %v1409 = vrot.slane %v1404, %v1408
    %v1410 = vlaneseq
    %v1411 = vshrl.u32 %v1410, 7
    %v1412 = vsub.s32 1, %v1411
    %v1413 = vrot.slane %v1404, %v1412
    %v1414 = vlaneseq
    %v1415 = vshrl.u32 %v1414, 7
    %v1416 = vsub.s32 2, %v1415
    %v1417 = vrot.slane %v1404, %v1416
    %v1418 = vlaneseq
    %v1419 = vshrl.u32 %v1418, 7
    %v1420 = vsub.s32 3, %v1419
    %v1421 = vrot.slane %v1404, %v1420
    %v1426 = vmul.f32 %v1402, %v1409
    %v1427 = vmul.f32 %v1400, %v1413
    %v1428 = vmul.f32 %v1398, %v1417
    %v1429 = vmul.f32 %v1396, %v1421
    %v1430 = vmul.f32 %v1403, %v1409
    %v1431 = vmul.f32 %v1401, %v1413
    %v1432 = vmul.f32 %v1399, %v1417
    %v1433 = vmul.f32 %v1397, %v1421
    %1434 = vst [vmem:[#allocation3 + $0x60] sm:$0xff] %v1426
    %1435 = vst [vmem:[#allocation3 + $0x68] sm:$0xff] %v1427
    %1436 = vst [vmem:[#allocation3 + $0x70] sm:$0xff] %v1428
    %1437 = vst [vmem:[#allocation3 + $0x78] sm:$0xff] %v1429
    %1438 = vst [vmem:[#allocation3 + $0x80] sm:$0xf] %v1430
    %1439 = vst [vmem:[#allocation3 + $0x88] sm:$0xf] %v1431
    %1440 = vst [vmem:[#allocation3 + $0x90] sm:$0xf] %v1432
    %1441 = vst [vmem:[#allocation3 + $0x98] sm:$0xf] %v1433
    %1442 = vrot.lane.b32.xlu0 %v1220, 1
    %v1443 = vpop.permute.xlu0 %1442
    %1444 = vrot.lane.b32.xlu0 %v1224, 1
    %v1445 = vpop.permute.xlu0 %1444
    %1446 = vrot.lane.b32.xlu0 %v1221, 1
    %v1447 = vpop.permute.xlu0 %1446
    %1448 = vrot.lane.b32.xlu0 %v1225, 1
    %v1449 = vpop.permute.xlu0 %1448
    %1450 = vrot.lane.b32.xlu0 %v1222, 1
    %v1451 = vpop.permute.xlu0 %1450
    %1452 = vrot.lane.b32.xlu0 %v1226, 1
    %v1453 = vpop.permute.xlu0 %1452
    %1454 = vrot.lane.b32.xlu0 %v1223, 1
    %v1455 = vpop.permute.xlu0 %1454
    %1456 = vrot.lane.b32.xlu0 %v1227, 1
    %v1457 = vpop.permute.xlu0 %1456
    %v1458 = vsel %vm221, %v1451, %v1455
    %v1459 = vsel %vm221, %v1453, %v1457
    %v1460 = vsel %vm221, %v1447, %v1451
    %v1461 = vsel %vm221, %v1449, %v1453
    %v1462 = vsel %vm221, %v1443, %v1447
    %v1463 = vsel %vm221, %v1445, %v1449
    %v1464 = vsel %vm221, %v1455, %v1443
    %v1465 = vsel %vm221, %v1457, %v1445
    %v1466 = vld [vmem:[%s226] ss:$8 sm:$0xf]
    %v1468 = vlaneseq
    %v1469 = vshrl.u32 %v1468, 7
    %v1470 = vsub.s32 0, %v1469
    %v1471 = vrot.slane %v1466, %v1470
    %v1472 = vlaneseq
    %v1473 = vshrl.u32 %v1472, 7
    %v1474 = vsub.s32 1, %v1473
    %v1475 = vrot.slane %v1466, %v1474
    %v1476 = vlaneseq
    %v1477 = vshrl.u32 %v1476, 7
    %v1478 = vsub.s32 2, %v1477
    %v1479 = vrot.slane %v1466, %v1478
    %v1480 = vlaneseq
    %v1481 = vshrl.u32 %v1480, 7
    %v1482 = vsub.s32 3, %v1481
    %v1483 = vrot.slane %v1466, %v1482
    %v1488 = vmul.f32 %v1464, %v1471
    %v1489 = vmul.f32 %v1462, %v1475
    %v1490 = vmul.f32 %v1460, %v1479
    %v1491 = vmul.f32 %v1458, %v1483
    %v1492 = vmul.f32 %v1465, %v1471
    %v1493 = vmul.f32 %v1463, %v1475
    %v1494 = vmul.f32 %v1461, %v1479
    %v1495 = vmul.f32 %v1459, %v1483
    %v1504 = vrot.slane %v1488, 4
    %v1505 = vrot.slane %v1489, 4
    %v1506 = vrot.slane %v1490, 4
    %v1507 = vrot.slane %v1491, 4
    %v1508 = vrot.slane %v1492, 4
    %v1509 = vsel %vm502, %v1504, %v1508
    %v1510 = vrot.slane %v1493, 4
    %v1511 = vsel %vm502, %v1505, %v1510
    %v1512 = vrot.slane %v1494, 4
    %v1513 = vsel %vm502, %v1506, %v1512
    %v1514 = vrot.slane %v1495, 4
    %v1515 = vsel %vm502, %v1507, %v1514
    %1524 = vst [vmem:[#allocation3 + $0x80] sm:$0xf0] %v1504
    %1525 = vst [vmem:[#allocation3 + $0x88] sm:$0xf0] %v1505
    %1526 = vst [vmem:[#allocation3 + $0x90] sm:$0xf0] %v1506
    %1527 = vst [vmem:[#allocation3 + $0x98] sm:$0xf0] %v1507
    %1528 = vst [vmem:[#allocation3 + $0xa0] sm:$0xff] %v1509
    %1529 = vst [vmem:[#allocation3 + $0xa8] sm:$0xff] %v1511
    %1530 = vst [vmem:[#allocation3 + $0xb0] sm:$0xff] %v1513
    %1531 = vst [vmem:[#allocation3 + $0xb8] sm:$0xff] %v1515
    %1532 = vst [vmem:[#allocation3 + $0xc0] sm:$0xff] %v1220
    %1533 = vst [vmem:[#allocation3 + $0xc8] sm:$0xff] %v1221
    %1534 = vst [vmem:[#allocation3 + $0xd0] sm:$0xff] %v1222
    %1535 = vst [vmem:[#allocation3 + $0xd8] sm:$0xff] %v1223
    %1536 = vst [vmem:[#allocation3 + $0xe0] sm:$0xf] %v1224
    %1537 = vst [vmem:[#allocation3 + $0xe8] sm:$0xf] %v1225
    %1538 = vst [vmem:[#allocation3 + $0xf0] sm:$0xf] %v1226
    %1539 = vst [vmem:[#allocation3 + $0xf8] sm:$0xf] %v1227
    %1540 = vrot.lane.b32.xlu0 %v1220, 127
    %v1541 = vpop.permute.xlu0 %1540
    %1542 = vrot.lane.b32.xlu0 %v1224, 127
    %v1543 = vpop.permute.xlu0 %1542
    %1544 = vrot.lane.b32.xlu0 %v1221, 127
    %v1545 = vpop.permute.xlu0 %1544
    %1546 = vrot.lane.b32.xlu0 %v1225, 127
    %v1547 = vpop.permute.xlu0 %1546
    %1548 = vrot.lane.b32.xlu0 %v1222, 127
    %v1549 = vpop.permute.xlu0 %1548
    %1550 = vrot.lane.b32.xlu0 %v1226, 127
    %v1551 = vpop.permute.xlu0 %1550
    %1552 = vrot.lane.b32.xlu0 %v1223, 127
    %v1553 = vpop.permute.xlu0 %1552
    %1554 = vrot.lane.b32.xlu0 %v1227, 127
    %v1555 = vpop.permute.xlu0 %1554
    %v1556 = vsel %vm281, %v1549, %v1553
    %v1557 = vsel %vm281, %v1551, %v1555
    %v1558 = vsel %vm281, %v1545, %v1549
    %v1559 = vsel %vm281, %v1547, %v1551
    %v1560 = vsel %vm281, %v1541, %v1545
    %v1561 = vsel %vm281, %v1543, %v1547
    %v1562 = vsel %vm281, %v1553, %v1541
    %v1563 = vsel %vm281, %v1555, %v1543
    %v1564 = vld [vmem:[%s286] ss:$8 sm:$0xf]
    %v1566 = vlaneseq
    %v1567 = vshrl.u32 %v1566, 7
    %v1568 = vsub.s32 0, %v1567
    %v1569 = vrot.slane %v1564, %v1568
    %v1570 = vlaneseq
    %v1571 = vshrl.u32 %v1570, 7
    %v1572 = vsub.s32 1, %v1571
    %v1573 = vrot.slane %v1564, %v1572
    %v1574 = vlaneseq
    %v1575 = vshrl.u32 %v1574, 7
    %v1576 = vsub.s32 2, %v1575
    %v1577 = vrot.slane %v1564, %v1576
    %v1578 = vlaneseq
    %v1579 = vshrl.u32 %v1578, 7
    %v1580 = vsub.s32 3, %v1579
    %v1581 = vrot.slane %v1564, %v1580
    %v1586 = vmul.f32 %v1560, %v1569
    %v1587 = vmul.f32 %v1558, %v1573
    %v1588 = vmul.f32 %v1556, %v1577
    %v1589 = vmul.f32 %v1562, %v1581
    %v1590 = vmul.f32 %v1561, %v1569
    %v1591 = vmul.f32 %v1559, %v1573
    %v1592 = vmul.f32 %v1557, %v1577
    %v1593 = vmul.f32 %v1563, %v1581
    %v1602 = vrot.slane %v1586, 4
    %v1603 = vrot.slane %v1587, 4
    %v1604 = vrot.slane %v1588, 4
    %v1605 = vrot.slane %v1589, 4
    %v1606 = vrot.slane %v1590, 4
    %v1607 = vsel %vm502, %v1602, %v1606
    %v1608 = vrot.slane %v1591, 4
    %v1609 = vsel %vm502, %v1603, %v1608
    %v1610 = vrot.slane %v1592, 4
    %v1611 = vsel %vm502, %v1604, %v1610
    %v1612 = vrot.slane %v1593, 4
    %v1613 = vsel %vm502, %v1605, %v1612
    %1622 = vst [vmem:[#allocation3 + $0xe0] sm:$0xf0] %v1602
    %1623 = vst [vmem:[#allocation3 + $0xe8] sm:$0xf0] %v1603
    %1624 = vst [vmem:[#allocation3 + $0xf0] sm:$0xf0] %v1604
    %1625 = vst [vmem:[#allocation3 + $0xf8] sm:$0xf0] %v1605
    %1626 = vst [vmem:[#allocation3 + $0x100] sm:$0xff] %v1607
    %1627 = vst [vmem:[#allocation3 + $0x108] sm:$0xff] %v1609
    %1628 = vst [vmem:[#allocation3 + $0x110] sm:$0xff] %v1611
    %1629 = vst [vmem:[#allocation3 + $0x118] sm:$0xff] %v1613
    %1630 = vrot.lane.b32.xlu0 %v1220, 113
    %v1631 = vpop.permute.xlu0 %1630
    %1632 = vrot.lane.b32.xlu0 %v1224, 113
    %v1633 = vpop.permute.xlu0 %1632
    %1634 = vrot.lane.b32.xlu0 %v1221, 113
    %v1635 = vpop.permute.xlu0 %1634
    %1636 = vrot.lane.b32.xlu0 %v1225, 113
    %v1637 = vpop.permute.xlu0 %1636
    %1638 = vrot.lane.b32.xlu0 %v1222, 113
    %v1639 = vpop.permute.xlu0 %1638
    %1640 = vrot.lane.b32.xlu0 %v1226, 113
    %v1641 = vpop.permute.xlu0 %1640
    %1642 = vrot.lane.b32.xlu0 %v1223, 113
    %v1643 = vpop.permute.xlu0 %1642
    %1644 = vrot.lane.b32.xlu0 %v1227, 113
    %v1645 = vpop.permute.xlu0 %1644
    %v1646 = vsel %vm337, %v1639, %v1643
    %v1647 = vsel %vm337, %v1641, %v1645
    %v1648 = vsel %vm337, %v1635, %v1639
    %v1649 = vsel %vm337, %v1637, %v1641
    %v1650 = vsel %vm337, %v1631, %v1635
    %v1651 = vsel %vm337, %v1633, %v1637
    %v1652 = vsel %vm337, %v1643, %v1631
    %v1653 = vsel %vm337, %v1645, %v1633
    %v1654 = vld [vmem:[%s342] ss:$8 sm:$0xf]
    %v1656 = vlaneseq
    %v1657 = vshrl.u32 %v1656, 7
    %v1658 = vsub.s32 0, %v1657
    %v1659 = vrot.slane %v1654, %v1658
    %v1660 = vlaneseq
    %v1661 = vshrl.u32 %v1660, 7
    %v1662 = vsub.s32 1, %v1661
    %v1663 = vrot.slane %v1654, %v1662
    %v1664 = vlaneseq
    %v1665 = vshrl.u32 %v1664, 7
    %v1666 = vsub.s32 2, %v1665
    %v1667 = vrot.slane %v1654, %v1666
    %v1668 = vlaneseq
    %v1669 = vshrl.u32 %v1668, 7
    %v1670 = vsub.s32 3, %v1669
    %v1671 = vrot.slane %v1654, %v1670
    %v1676 = vmul.f32 %v1650, %v1659
    %v1677 = vmul.f32 %v1648, %v1663
    %v1678 = vmul.f32 %v1646, %v1667
    %v1679 = vmul.f32 %v1652, %v1671
    %v1680 = vmul.f32 %v1651, %v1659
    %v1681 = vmul.f32 %v1649, %v1663
    %v1682 = vmul.f32 %v1647, %v1667
    %v1683 = vmul.f32 %v1653, %v1671
    %1684 = vst [vmem:[#allocation3 + $0x120] sm:$0xff] %v1676
    %1685 = vst [vmem:[#allocation3 + $0x128] sm:$0xff] %v1677
    %1686 = vst [vmem:[#allocation3 + $0x130] sm:$0xff] %v1678
    %1687 = vst [vmem:[#allocation3 + $0x138] sm:$0xff] %v1679
    %1688 = vst [vmem:[#allocation3 + $0x140] sm:$0xf] %v1680
    %1689 = vst [vmem:[#allocation3 + $0x148] sm:$0xf] %v1681
    %1690 = vst [vmem:[#allocation3 + $0x150] sm:$0xf] %v1682
    %1691 = vst [vmem:[#allocation3 + $0x158] sm:$0xf] %v1683
    %1692 = vrot.lane.b32.xlu0 %v1220, 112
    %v1693 = vpop.permute.xlu0 %1692
    %1694 = vrot.lane.b32.xlu0 %v1224, 112
    %v1695 = vpop.permute.xlu0 %1694
    %1696 = vrot.lane.b32.xlu0 %v1221, 112
    %v1697 = vpop.permute.xlu0 %1696
    %1698 = vrot.lane.b32.xlu0 %v1225, 112
    %v1699 = vpop.permute.xlu0 %1698
    %1700 = vrot.lane.b32.xlu0 %v1222, 112
    %v1701 = vpop.permute.xlu0 %1700
    %1702 = vrot.lane.b32.xlu0 %v1226, 112
    %v1703 = vpop.permute.xlu0 %1702
    %1704 = vrot.lane.b32.xlu0 %v1223, 112
    %v1705 = vpop.permute.xlu0 %1704
    %1706 = vrot.lane.b32.xlu0 %v1227, 112
    %v1707 = vpop.permute.xlu0 %1706
    %v1708 = vsel %vm381, %v1701, %v1705
    %v1709 = vsel %vm381, %v1703, %v1707
    %v1710 = vsel %vm381, %v1697, %v1701
    %v1711 = vsel %vm381, %v1699, %v1703
    %v1712 = vsel %vm381, %v1693, %v1697
    %v1713 = vsel %vm381, %v1695, %v1699
    %v1714 = vsel %vm381, %v1705, %v1693
    %v1715 = vsel %vm381, %v1707, %v1695
    %v1716 = vld [vmem:[%s386] ss:$8 sm:$0xf]
    %v1718 = vlaneseq
    %v1719 = vshrl.u32 %v1718, 7
    %v1720 = vsub.s32 0, %v1719
    %v1721 = vrot.slane %v1716, %v1720
    %v1722 = vlaneseq
    %v1723 = vshrl.u32 %v1722, 7
    %v1724 = vsub.s32 1, %v1723
    %v1725 = vrot.slane %v1716, %v1724
    %v1726 = vlaneseq
    %v1727 = vshrl.u32 %v1726, 7
    %v1728 = vsub.s32 2, %v1727
    %v1729 = vrot.slane %v1716, %v1728
    %v1730 = vlaneseq
    %v1731 = vshrl.u32 %v1730, 7
    %v1732 = vsub.s32 3, %v1731
    %v1733 = vrot.slane %v1716, %v1732
    %v1738 = vmul.f32 %v1712, %v1721
    %v1739 = vmul.f32 %v1710, %v1725
    %v1740 = vmul.f32 %v1708, %v1729
    %v1741 = vmul.f32 %v1714, %v1733
    %v1742 = vmul.f32 %v1713, %v1721
    %v1743 = vmul.f32 %v1711, %v1725
    %v1744 = vmul.f32 %v1709, %v1729
    %v1745 = vmul.f32 %v1715, %v1733
    %v1754 = vrot.slane %v1738, 4
    %v1755 = vrot.slane %v1739, 4
    %v1756 = vrot.slane %v1740, 4
    %v1757 = vrot.slane %v1741, 4
    %v1758 = vrot.slane %v1742, 4
    %v1759 = vsel %vm502, %v1754, %v1758
    %v1760 = vrot.slane %v1743, 4
    %v1761 = vsel %vm502, %v1755, %v1760
    %v1762 = vrot.slane %v1744, 4
    %v1763 = vsel %vm502, %v1756, %v1762
    %v1764 = vrot.slane %v1745, 4
    %v1765 = vsel %vm502, %v1757, %v1764
    %1774 = vst [vmem:[#allocation3 + $0x140] sm:$0xf0] %v1754
    %1775 = vst [vmem:[#allocation3 + $0x148] sm:$0xf0] %v1755
    %1776 = vst [vmem:[#allocation3 + $0x150] sm:$0xf0] %v1756
    %1777 = vst [vmem:[#allocation3 + $0x158] sm:$0xf0] %v1757
    %1778 = vst [vmem:[#allocation3 + $0x160] sm:$0xff] %v1759
    %1779 = vst [vmem:[#allocation3 + $0x168] sm:$0xff] %v1761
    %1780 = vst [vmem:[#allocation3 + $0x170] sm:$0xff] %v1763
    %1781 = vst [vmem:[#allocation3 + $0x178] sm:$0xff] %v1765
    %1782 = vrot.lane.b32.xlu0 %v1220, 111
    %v1783 = vpop.permute.xlu0 %1782
    %1784 = vrot.lane.b32.xlu0 %v1224, 111
    %v1785 = vpop.permute.xlu0 %1784
    %1786 = vrot.lane.b32.xlu0 %v1221, 111
    %v1787 = vpop.permute.xlu0 %1786
    %1788 = vrot.lane.b32.xlu0 %v1225, 111
    %v1789 = vpop.permute.xlu0 %1788
    %1790 = vrot.lane.b32.xlu0 %v1222, 111
    %v1791 = vpop.permute.xlu0 %1790
    %1792 = vrot.lane.b32.xlu0 %v1226, 111
    %v1793 = vpop.permute.xlu0 %1792
    %1794 = vrot.lane.b32.xlu0 %v1223, 111
    %v1795 = vpop.permute.xlu0 %1794
    %1796 = vrot.lane.b32.xlu0 %v1227, 111
    %v1797 = vpop.permute.xlu0 %1796
    %v1798 = vsel %vm437, %v1791, %v1795
    %v1799 = vsel %vm437, %v1793, %v1797
    %v1800 = vsel %vm437, %v1787, %v1791
    %v1801 = vsel %vm437, %v1789, %v1793
    %v1802 = vsel %vm437, %v1783, %v1787
    %v1803 = vsel %vm437, %v1785, %v1789
    %v1804 = vsel %vm437, %v1795, %v1783
    %v1805 = vsel %vm437, %v1797, %v1785
    %v1806 = vld [vmem:[%s442] ss:$8 sm:$0xf]
    %v1808 = vlaneseq
    %v1809 = vshrl.u32 %v1808, 7
    %v1810 = vsub.s32 0, %v1809
    %v1811 = vrot.slane %v1806, %v1810
    %v1812 = vlaneseq
    %v1813 = vshrl.u32 %v1812, 7
    %v1814 = vsub.s32 1, %v1813
    %v1815 = vrot.slane %v1806, %v1814
    %v1816 = vlaneseq
    %v1817 = vshrl.u32 %v1816, 7
    %v1818 = vsub.s32 2, %v1817
    %v1819 = vrot.slane %v1806, %v1818
    %v1820 = vlaneseq
    %v1821 = vshrl.u32 %v1820, 7
    %v1822 = vsub.s32 3, %v1821
    %v1823 = vrot.slane %v1806, %v1822
    %v1828 = vmul.f32 %v1802, %v1811
    %v1829 = vmul.f32 %v1800, %v1815
    %v1830 = vmul.f32 %v1798, %v1819
    %v1831 = vmul.f32 %v1804, %v1823
    %v1832 = vmul.f32 %v1803, %v1811
    %v1833 = vmul.f32 %v1801, %v1815
    %v1834 = vmul.f32 %v1799, %v1819
    %v1835 = vmul.f32 %v1805, %v1823
    %1836 = vst [vmem:[#allocation3 + $0x180] sm:$0xff] %v1828
    %1837 = vst [vmem:[#allocation3 + $0x188] sm:$0xff] %v1829
    %1838 = vst [vmem:[#allocation3 + $0x190] sm:$0xff] %v1830
    %1839 = vst [vmem:[#allocation3 + $0x198] sm:$0xff] %v1831
    %1840 = vst [vmem:[#allocation3 + $0x1a0] sm:$0xf] %v1832
    %1841 = vst [vmem:[#allocation3 + $0x1a8] sm:$0xf] %v1833
    %1842 = vst [vmem:[#allocation3 + $0x1b0] sm:$0xf] %v1834
    %1843 = vst [vmem:[#allocation3 + $0x1b8] sm:$0xf] %v1835
    %v1844 = vld [vmem:[#allocation3] sm:$0xff]
    %v1845 = vld [vmem:[#allocation3 + $0x8] sm:$0xff]
    %v1846 = vld [vmem:[#allocation3 + $0x10] sm:$0xff]
    %v1847 = vld [vmem:[#allocation3 + $0x18] sm:$0xff]
    %v1848 = vld [vmem:[#allocation3 + $0x20] sm:$0xff]
    %v1849 = vld [vmem:[#allocation3 + $0x28] sm:$0xff]
    %v1850 = vld [vmem:[#allocation3 + $0x30] sm:$0xff]
    %v1851 = vld [vmem:[#allocation3 + $0x38] sm:$0xff]
    %v1852 = vld [vmem:[#allocation3 + $0x40] sm:$0xff]
    %v1853 = vld [vmem:[#allocation3 + $0x48] sm:$0xff]
    %v1854 = vld [vmem:[#allocation3 + $0x50] sm:$0xff]
    %v1855 = vld [vmem:[#allocation3 + $0x58] sm:$0xff]
    %v1856 = vld [vmem:[#allocation3 + $0x60] sm:$0xff]
    %v1857 = vld [vmem:[#allocation3 + $0x68] sm:$0xff]
    %v1858 = vld [vmem:[#allocation3 + $0x70] sm:$0xff]
    %v1859 = vld [vmem:[#allocation3 + $0x78] sm:$0xff]
    %v1860 = vld [vmem:[#allocation3 + $0x80] sm:$0xff]
    %v1861 = vld [vmem:[#allocation3 + $0x88] sm:$0xff]
    %v1862 = vld [vmem:[#allocation3 + $0x90] sm:$0xff]
    %v1863 = vld [vmem:[#allocation3 + $0x98] sm:$0xff]
    %v1864 = vld [vmem:[#allocation3 + $0xa0] sm:$0xff]
    %v1865 = vld [vmem:[#allocation3 + $0xa8] sm:$0xff]
    %v1866 = vld [vmem:[#allocation3 + $0xb0] sm:$0xff]
    %v1867 = vld [vmem:[#allocation3 + $0xb8] sm:$0xff]
    %v1868 = vld [vmem:[#allocation3 + $0xc0] sm:$0xff]
    %v1869 = vld [vmem:[#allocation3 + $0xc8] sm:$0xff]
    %v1870 = vld [vmem:[#allocation3 + $0xd0] sm:$0xff]
    %v1871 = vld [vmem:[#allocation3 + $0xd8] sm:$0xff]
    %v1872 = vld [vmem:[#allocation3 + $0xe0] sm:$0xff]
    %v1873 = vld [vmem:[#allocation3 + $0xe8] sm:$0xff]
    %v1874 = vld [vmem:[#allocation3 + $0xf0] sm:$0xff]
    %v1875 = vld [vmem:[#allocation3 + $0xf8] sm:$0xff]
    %v1876 = vld [vmem:[#allocation3 + $0x100] sm:$0xff]
    %v1877 = vld [vmem:[#allocation3 + $0x108] sm:$0xff]
    %v1878 = vld [vmem:[#allocation3 + $0x110] sm:$0xff]
    %v1879 = vld [vmem:[#allocation3 + $0x118] sm:$0xff]
    %v1880 = vld [vmem:[#allocation3 + $0x120] sm:$0xff]
    %v1881 = vld [vmem:[#allocation3 + $0x128] sm:$0xff]
    %v1882 = vld [vmem:[#allocation3 + $0x130] sm:$0xff]
    %v1883 = vld [vmem:[#allocation3 + $0x138] sm:$0xff]
    %v1884 = vld [vmem:[#allocation3 + $0x140] sm:$0xff]
    %v1885 = vld [vmem:[#allocation3 + $0x148] sm:$0xff]
    %v1886 = vld [vmem:[#allocation3 + $0x150] sm:$0xff]
    %v1887 = vld [vmem:[#allocation3 + $0x158] sm:$0xff]
    %v1888 = vld [vmem:[#allocation3 + $0x160] sm:$0xff]
    %v1889 = vld [vmem:[#allocation3 + $0x168] sm:$0xff]
    %v1890 = vld [vmem:[#allocation3 + $0x170] sm:$0xff]
    %v1891 = vld [vmem:[#allocation3 + $0x178] sm:$0xff]
    %v1892 = vld [vmem:[#allocation3 + $0x180] sm:$0xff]
    %v1893 = vld [vmem:[#allocation3 + $0x188] sm:$0xff]
    %v1894 = vld [vmem:[#allocation3 + $0x190] sm:$0xff]
    %v1895 = vld [vmem:[#allocation3 + $0x198] sm:$0xff]
    %v1896 = vld [vmem:[#allocation3 + $0x1a0] sm:$0xf]
    %v1897 = vld [vmem:[#allocation3 + $0x1a8] sm:$0xf]
    %v1898 = vld [vmem:[#allocation3 + $0x1b0] sm:$0xf]
    %v1899 = vld [vmem:[#allocation3 + $0x1b8] sm:$0xf]
    %1901 = vset.pattern.permute.xlu0 0
    %1902 = vperm.xlu0 %1901, %v1219
    %v1903 = vpop.permute.xlu0 %1902
    %vm1905 = vcmask 883712
    %v1907 = vsel %vm1905, %v1218, 0
    %v1910 = vsel %vm502, %v1896, 0
    %v1913 = vsel %vm502, %v1897, 0
    %v1916 = vsel %vm502, %v1898, 0
    %v1919 = vsel %vm502, %v1899, 0
    %1921 = vmatprep.subr.mxu0 0.0
    %1922 = vmatpush1.msra.mxu0 0.0
    %1923 = vmatprep.subr.mxu0 0.0
    %1924 = vmatpush1.msra.mxu0 0.0
    %1925 = vmatprep.subr.mxu0 %v1913
    %1926 = vmatpush1.msra.mxu0 %v1910
    %1927 = vmatprep.subr.mxu0 %v1893
    %1928 = vmatpush1.msra.mxu0 %v1892
    %1929 = vmatprep.subr.mxu0 %v1889
    %1930 = vmatpush1.msra.mxu0 %v1888
    %1931 = vmatprep.subr.mxu0 %v1885
    %1932 = vmatpush1.msra.mxu0 %v1884
    %1933 = vmatprep.subr.mxu0 %v1881
    %1934 = vmatpush1.msra.mxu0 %v1880
    %1935 = vmatprep.subr.mxu0 %v1877
    %1936 = vmatpush1.msra.mxu0 %v1876
    %1937 = vmatprep.subr.mxu0 %v1873
    %1938 = vmatpush1.msra.mxu0 %v1872
    %1939 = vmatprep.subr.mxu0 %v1869
    %1940 = vmatpush1.msra.mxu0 %v1868
    %1941 = vmatprep.subr.mxu0 %v1865
    %1942 = vmatpush1.msra.mxu0 %v1864
    %1943 = vmatprep.subr.mxu0 %v1861
    %1944 = vmatpush1.msra.mxu0 %v1860
    %1945 = vmatprep.subr.mxu0 %v1857
    %1946 = vmatpush1.msra.mxu0 %v1856
    %1947 = vmatprep.subr.mxu0 %v1853
    %1948 = vmatpush1.msra.mxu0 %v1852
    %1949 = vmatprep.subr.mxu0 %v1849
    %1950 = vmatpush1.msra.mxu0 %v1848
    %1951 = vmatprep.subr.mxu0 %v1845
    %1952 = vmatpush1.msra.mxu0 %v1844
    %1953 = vmatprep.subr.mxu0 0.0
    %1954 = vmatpush2.msra.mxu0 0.0
    %1955 = vmatprep.subr.mxu0 0.0
    %1956 = vmatpush2.msra.mxu0 0.0
    %1957 = vmatprep.subr.mxu0 0.0
    %1958 = vmatpush2.msra.mxu0 0.0
    %1959 = vmatprep.subr.mxu0 0.0
    %1960 = vmatpush2.msra.mxu0 0.0
    %1961 = vmatprep.subr.mxu0 0.0
    %1962 = vmatpush2.msra.mxu0 0.0
    %1963 = vmatprep.subr.mxu0 0.0
    %1964 = vmatpush2.msra.mxu0 0.0
    %1965 = vmatprep.subr.mxu0 0.0
    %1966 = vmatpush2.msra.mxu0 0.0
    %1967 = vmatprep.subr.mxu0 0.0
    %1968 = vmatpush2.msra.mxu0 0.0
    %1969 = vmatprep.subr.mxu0 0.0
    %1970 = vmatpush2.msra.mxu0 0.0
    %1971 = vmatprep.subr.mxu0 0.0
    %1972 = vmatpush2.msra.mxu0 0.0
    %1973 = vmatprep.subr.mxu0 0.0
    %1974 = vmatpush2.msra.mxu0 0.0
    %1975 = vmatprep.subr.mxu0 0.0
    %1976 = vmatpush2.msra.mxu0 0.0
    %1977 = vmatprep.subr.mxu0 0.0
    %1978 = vmatpush2.msra.mxu0 0.0
    %1979 = vmatprep.subr.mxu0 0.0
    %1980 = vmatpush2.msra.mxu0 0.0
    %1981 = vmatprep.subr.mxu0 0.0
    %1982 = vmatpush2.msra.mxu0 0.0
    %1983 = vmatprep.subr.mxu0 0.0
    %1984 = vmatpush2.msra.mxu0 0.0
    %1985 = vmatprep.mubr.f32.mxu0 0.0
    %1986 = vmatmul.mubr.f32.gmra.mxu0 %v1907
    %v1987 = vpop.f32.mrf.mxu0
    %v1988 = vadd.f32 %v1903, %v1987
    %v1989 = vpop.f32.mrf.mxu0
    %v1990 = vadd.f32 %v1903, %v1989
    %1991 = vdwg.mxu0
    %1992 = vmatprep.subr.mxu0 0.0
    %1993 = vmatpush1.msra.mxu0 0.0
    %1994 = vmatprep.subr.mxu0 0.0
    %1995 = vmatpush1.msra.mxu0 0.0
    %1996 = vmatprep.subr.mxu0 %v1919
    %1997 = vmatpush1.msra.mxu0 %v1916
    %1998 = vmatprep.subr.mxu0 %v1895
    %1999 = vmatpush1.msra.mxu0 %v1894
    %2000 = vmatprep.subr.mxu0 %v1891
    %2001 = vmatpush1.msra.mxu0 %v1890
    %2002 = vmatprep.subr.mxu0 %v1887
    %2003 = vmatpush1.msra.mxu0 %v1886
    %2004 = vmatprep.subr.mxu0 %v1883
    %2005 = vmatpush1.msra.mxu0 %v1882
    %2006 = vmatprep.subr.mxu0 %v1879
    %2007 = vmatpush1.msra.mxu0 %v1878
    %2008 = vmatprep.subr.mxu0 %v1875
    %2009 = vmatpush1.msra.mxu0 %v1874
    %2010 = vmatprep.subr.mxu0 %v1871
    %2011 = vmatpush1.msra.mxu0 %v1870
    %2012 = vmatprep.subr.mxu0 %v1867
    %2013 = vmatpush1.msra.mxu0 %v1866
    %2014 = vmatprep.subr.mxu0 %v1863
    %2015 = vmatpush1.msra.mxu0 %v1862
    %2016 = vmatprep.subr.mxu0 %v1859
    %2017 = vmatpush1.msra.mxu0 %v1858
    %2018 = vmatprep.subr.mxu0 %v1855
    %2019 = vmatpush1.msra.mxu0 %v1854
    %2020 = vmatprep.subr.mxu0 %v1851
    %2021 = vmatpush1.msra.mxu0 %v1850
    %2022 = vmatprep.subr.mxu0 %v1847
    %2023 = vmatpush1.msra.mxu0 %v1846
    %2024 = vmatprep.subr.mxu0 0.0
    %2025 = vmatpush2.msra.mxu0 0.0
    %2026 = vmatprep.subr.mxu0 0.0
    %2027 = vmatpush2.msra.mxu0 0.0
    %2028 = vmatprep.subr.mxu0 0.0
    %2029 = vmatpush2.msra.mxu0 0.0
    %2030 = vmatprep.subr.mxu0 0.0
    %2031 = vmatpush2.msra.mxu0 0.0
    %2032 = vmatprep.subr.mxu0 0.0
    %2033 = vmatpush2.msra.mxu0 0.0
    %2034 = vmatprep.subr.mxu0 0.0
    %2035 = vmatpush2.msra.mxu0 0.0
    %2036 = vmatprep.subr.mxu0 0.0
    %2037 = vmatpush2.msra.mxu0 0.0
    %2038 = vmatprep.subr.mxu0 0.0
    %2039 = vmatpush2.msra.mxu0 0.0
    %2040 = vmatprep.subr.mxu0 0.0
    %2041 = vmatpush2.msra.mxu0 0.0
    %2042 = vmatprep.subr.mxu0 0.0
    %2043 = vmatpush2.msra.mxu0 0.0
    %2044 = vmatprep.subr.mxu0 0.0
    %2045 = vmatpush2.msra.mxu0 0.0
    %2046 = vmatprep.subr.mxu0 0.0
    %2047 = vmatpush2.msra.mxu0 0.0
    %2048 = vmatprep.subr.mxu0 0.0
    %2049 = vmatpush2.msra.mxu0 0.0
    %2050 = vmatprep.subr.mxu0 0.0
    %2051 = vmatpush2.msra.mxu0 0.0
    %2052 = vmatprep.subr.mxu0 0.0
    %2053 = vmatpush2.msra.mxu0 0.0
    %2054 = vmatprep.subr.mxu0 0.0
    %2055 = vmatpush2.msra.mxu0 0.0
    %2056 = vmatprep.mubr.f32.mxu0 0.0
    %2057 = vmatmul.mubr.f32.gmra.mxu0 %v1907
    %v2058 = vpop.f32.mrf.mxu0
    %v2059 = vadd.f32 %v1903, %v2058
    %v2060 = vpop.f32.mrf.mxu0
    %v2061 = vadd.f32 %v1903, %v2060
    %2062 = vdwg.mxu0
    %v2063 = vmax.f32 %v1988, 0.0
    %v2064 = vmax.f32 %v1990, 0.0
    %v2065 = vmax.f32 %v2059, 0.0
    %v2066 = vmax.f32 %v2061, 0.0
    %v2071 = vrot.slane %v2063, 4
    %v2072 = vrot.slane %v2064, 4
    %v2073 = vrot.slane %v2065, 4
    %v2074 = vrot.slane %v2066, 4
    %2079 = vst [vmem:[#allocation2 + $0x20] sm:$0xf0] %v2071
    %2080 = vst [vmem:[#allocation2 + $0x28] sm:$0xf0] %v2072
    %2081 = vst [vmem:[#allocation2 + $0x30] sm:$0xf0] %v2073
    %2082 = vst [vmem:[#allocation2 + $0x38] sm:$0xf0] %v2074
    %v2083 = vld [vmem:[%s8] sm:$0xf]
    %v2084 = vld [vmem:[#allocation2] sm:$0xff]
    %v2085 = vld [vmem:[#allocation2 + $0x8] sm:$0xff]
    %v2086 = vld [vmem:[#allocation2 + $0x10] sm:$0xff]
    %v2087 = vld [vmem:[#allocation2 + $0x18] sm:$0xff]
    %v2088 = vld [vmem:[#allocation2 + $0x20] sm:$0xff]
    %v2089 = vld [vmem:[#allocation2 + $0x28] sm:$0xff]
    %v2090 = vld [vmem:[#allocation2 + $0x30] sm:$0xff]
    %v2091 = vld [vmem:[#allocation2 + $0x38] sm:$0xff]
    %v2092 = vld [vmem:[%s9] sm:$0xf]
    %2094 = vset.pattern.permute.xlu0 0
    %2095 = vperm.xlu0 %2094, %v2092
    %v2096 = vpop.permute.xlu0 %2095
    %vm2098 = vcmask 130048
    %v2100 = vsel %vm2098, %v2083, 0
    %2102 = vmatprep.subr.mxu0 0.0
    %2103 = vmatpush1.msra.mxu0 0.0
    %2104 = vmatprep.subr.mxu0 0.0
    %2105 = vmatpush1.msra.mxu0 0.0
    %2106 = vmatprep.subr.mxu0 0.0
    %2107 = vmatpush1.msra.mxu0 0.0
    %2108 = vmatprep.subr.mxu0 0.0
    %2109 = vmatpush1.msra.mxu0 0.0
    %2110 = vmatprep.subr.mxu0 0.0
    %2111 = vmatpush1.msra.mxu0 0.0
    %2112 = vmatprep.subr.mxu0 0.0
    %2113 = vmatpush1.msra.mxu0 0.0
    %2114 = vmatprep.subr.mxu0 0.0
    %2115 = vmatpush1.msra.mxu0 0.0
    %2116 = vmatprep.subr.mxu0 0.0
    %2117 = vmatpush1.msra.mxu0 0.0
    %2118 = vmatprep.subr.mxu0 0.0
    %2119 = vmatpush1.msra.mxu0 0.0
    %2120 = vmatprep.subr.mxu0 0.0
    %2121 = vmatpush1.msra.mxu0 0.0
    %2122 = vmatprep.subr.mxu0 0.0
    %2123 = vmatpush1.msra.mxu0 0.0
    %2124 = vmatprep.subr.mxu0 0.0
    %2125 = vmatpush1.msra.mxu0 0.0
    %2126 = vmatprep.subr.mxu0 0.0
    %2127 = vmatpush1.msra.mxu0 0.0
    %2128 = vmatprep.subr.mxu0 0.0
    %2129 = vmatpush1.msra.mxu0 0.0
    %2130 = vmatprep.subr.mxu0 %v2089
    %2131 = vmatpush1.msra.mxu0 %v2088
    %2132 = vmatprep.subr.mxu0 %v2085
    %2133 = vmatpush1.msra.mxu0 %v2084
    %2134 = vmatprep.subr.mxu0 0.0
    %2135 = vmatpush2.msra.mxu0 0.0
    %2136 = vmatprep.subr.mxu0 0.0
    %2137 = vmatpush2.msra.mxu0 0.0
    %2138 = vmatprep.subr.mxu0 0.0
    %2139 = vmatpush2.msra.mxu0 0.0
    %2140 = vmatprep.subr.mxu0 0.0
    %2141 = vmatpush2.msra.mxu0 0.0
    %2142 = vmatprep.subr.mxu0 0.0
    %2143 = vmatpush2.msra.mxu0 0.0
    %2144 = vmatprep.subr.mxu0 0.0
    %2145 = vmatpush2.msra.mxu0 0.0
    %2146 = vmatprep.subr.mxu0 0.0
    %2147 = vmatpush2.msra.mxu0 0.0
    %2148 = vmatprep.subr.mxu0 0.0
    %2149 = vmatpush2.msra.mxu0 0.0
    %2150 = vmatprep.subr.mxu0 0.0
    %2151 = vmatpush2.msra.mxu0 0.0
    %2152 = vmatprep.subr.mxu0 0.0
    %2153 = vmatpush2.msra.mxu0 0.0
    %2154 = vmatprep.subr.mxu0 0.0
    %2155 = vmatpush2.msra.mxu0 0.0
    %2156 = vmatprep.subr.mxu0 0.0
    %2157 = vmatpush2.msra.mxu0 0.0
    %2158 = vmatprep.subr.mxu0 0.0
    %2159 = vmatpush2.msra.mxu0 0.0
    %2160 = vmatprep.subr.mxu0 0.0
    %2161 = vmatpush2.msra.mxu0 0.0
    %2162 = vmatprep.subr.mxu0 0.0
    %2163 = vmatpush2.msra.mxu0 0.0
    %2164 = vmatprep.subr.mxu0 0.0
    %2165 = vmatpush2.msra.mxu0 0.0
    %2166 = vmatprep.mubr.f32.mxu0 0.0
    %2167 = vmatmul.mubr.f32.gmra.mxu0 %v2100
    %v2168 = vpop.f32.mrf.mxu0
    %v2169 = vadd.f32 %v2096, %v2168
    %v2170 = vpop.f32.mrf.mxu0
    %v2171 = vadd.f32 %v2096, %v2170
    %2172 = vdwg.mxu0
    %2173 = vmatprep.subr.mxu0 0.0
    %2174 = vmatpush1.msra.mxu0 0.0
    %2175 = vmatprep.subr.mxu0 0.0
    %2176 = vmatpush1.msra.mxu0 0.0
    %2177 = vmatprep.subr.mxu0 0.0
    %2178 = vmatpush1.msra.mxu0 0.0
    %2179 = vmatprep.subr.mxu0 0.0
    %2180 = vmatpush1.msra.mxu0 0.0
    %2181 = vmatprep.subr.mxu0 0.0
    %2182 = vmatpush1.msra.mxu0 0.0
    %2183 = vmatprep.subr.mxu0 0.0
    %2184 = vmatpush1.msra.mxu0 0.0
    %2185 = vmatprep.subr.mxu0 0.0
    %2186 = vmatpush1.msra.mxu0 0.0
    %2187 = vmatprep.subr.mxu0 0.0
    %2188 = vmatpush1.msra.mxu0 0.0
    %2189 = vmatprep.subr.mxu0 0.0
    %2190 = vmatpush1.msra.mxu0 0.0
    %2191 = vmatprep.subr.mxu0 0.0
    %2192 = vmatpush1.msra.mxu0 0.0
    %2193 = vmatprep.subr.mxu0 0.0
    %2194 = vmatpush1.msra.mxu0 0.0
    %2195 = vmatprep.subr.mxu0 0.0
    %2196 = vmatpush1.msra.mxu0 0.0
    %2197 = vmatprep.subr.mxu0 0.0
    %2198 = vmatpush1.msra.mxu0 0.0
    %2199 = vmatprep.subr.mxu0 0.0
    %2200 = vmatpush1.msra.mxu0 0.0
    %2201 = vmatprep.subr.mxu0 %v2091
    %2202 = vmatpush1.msra.mxu0 %v2090
    %2203 = vmatprep.subr.mxu0 %v2087
    %2204 = vmatpush1.msra.mxu0 %v2086
    %2205 = vmatprep.subr.mxu0 0.0
    %2206 = vmatpush2.msra.mxu0 0.0
    %2207 = vmatprep.subr.mxu0 0.0
    %2208 = vmatpush2.msra.mxu0 0.0
    %2209 = vmatprep.subr.mxu0 0.0
    %2210 = vmatpush2.msra.mxu0 0.0
    %2211 = vmatprep.subr.mxu0 0.0
    %2212 = vmatpush2.msra.mxu0 0.0
    %2213 = vmatprep.subr.mxu0 0.0
    %2214 = vmatpush2.msra.mxu0 0.0
    %2215 = vmatprep.subr.mxu0 0.0
    %2216 = vmatpush2.msra.mxu0 0.0
    %2217 = vmatprep.subr.mxu0 0.0
    %2218 = vmatpush2.msra.mxu0 0.0
    %2219 = vmatprep.subr.mxu0 0.0
    %2220 = vmatpush2.msra.mxu0 0.0
    %2221 = vmatprep.subr.mxu0 0.0
    %2222 = vmatpush2.msra.mxu0 0.0
    %2223 = vmatprep.subr.mxu0 0.0
    %2224 = vmatpush2.msra.mxu0 0.0
    %2225 = vmatprep.subr.mxu0 0.0
    %2226 = vmatpush2.msra.mxu0 0.0
    %2227 = vmatprep.subr.mxu0 0.0
    %2228 = vmatpush2.msra.mxu0 0.0
    %2229 = vmatprep.subr.mxu0 0.0
    %2230 = vmatpush2.msra.mxu0 0.0
    %2231 = vmatprep.subr.mxu0 0.0
    %2232 = vmatpush2.msra.mxu0 0.0
    %2233 = vmatprep.subr.mxu0 0.0
    %2234 = vmatpush2.msra.mxu0 0.0
    %2235 = vmatprep.subr.mxu0 0.0
    %2236 = vmatpush2.msra.mxu0 0.0
    %2237 = vmatprep.mubr.f32.mxu0 0.0
    %2238 = vmatmul.mubr.f32.gmra.mxu0 %v2100
    %v2239 = vpop.f32.mrf.mxu0
    %v2240 = vadd.f32 %v2096, %v2239
    %v2241 = vpop.f32.mrf.mxu0
    %v2242 = vadd.f32 %v2096, %v2241
    %2243 = vdwg.mxu0
    %v2248 = vcombine.low %v2169, %v2171
    %v2249 = vcombine.low %v2240, %v2242
    %2252 = vst [vmem:[#allocation7] sm:$0xff] %v2248
    %2253 = vst [vmem:[#allocation7 + $0x8] sm:$0xff] %v2249
    // Predicated region
    $region46: #{tpu_custom_call.1} parent=1 // pred_check
      _
    $region47: #{tpu_custom_call.1} parent=1 // pred_check_branch
      %2255 = sbr.rel (0) target = $region49
    $region48: #{tpu_custom_call.1} parent=1 // pred_region
      %s2257 = ssub.s32 256, 256
      %2258 = vsyncadd [#allocation6], %s2257
      %s2260 = sshll.u32 [#allocation7], 4
      %s2261 = int_to_ptr.vmem [resolvable:$true] %s2260
      %2263 = dma.vmem_to_hbm [thread:$0]  %s2261, 256, %s10, [#allocation6]
    $region49: #{tpu_custom_call.1} parent=1 // pred_fallthru
      _
    // Predicated region
    $region50: #{tpu_custom_call.1} parent=1 // pred_check
      _
    $region51: #{tpu_custom_call.1} parent=1 // pred_check_branch
      %2265 = sbr.rel (0) target = $region53
    $region52: #{tpu_custom_call.1} parent=1 // pred_region
      %2266 = dma.done [#allocation6], 256
    $region53: #{tpu_custom_call.1} parent=1 // pred_fallthru
      _
    %2267 = vsyncpa [#allocation5], 1
    %2268 = vsyncpa [#allocation6], 1

</llo_original>
